<compile_context>
chip_gen: v5e
topology: v5e:2x2
jax: 0.10.0
libtpu: 0.0.40
codegen_flags: <defaults>
</compile_context>

<pallas_src>
import functools

import jax
import jax.numpy as jnp
from jax.experimental import pallas as pl
from jax.experimental.pallas import tpu as pltpu


# ----------------------------------------------------------------------------
# Kernels
# ----------------------------------------------------------------------------
def _resblock_kernel_shortcut(x_ref, w0_ref, b0_ref, w1_ref, ws_ref, b1_ref,
                              o_ref, *, compute_dtype):
    """size_in != size_out: learned linear shortcut (two f32-accumulated dots)."""
    x = x_ref[...]                                     # (tm, size_in) f32
    h0 = jnp.maximum(x, 0.0)                           # relu(x), f32 VPU
    net = jnp.dot(h0.astype(compute_dtype), w0_ref[...],
                  preferred_element_type=jnp.float32) + b0_ref[...]
    hn = jnp.maximum(net, 0.0)                         # relu(net), f32
    dx = jnp.dot(hn.astype(compute_dtype), w1_ref[...],
                 preferred_element_type=jnp.float32)
    xs = jnp.dot(x.astype(compute_dtype), ws_ref[...],
                 preferred_element_type=jnp.float32)
    o_ref[...] = (xs + dx + b1_ref[...]).astype(o_ref.dtype)


def _resblock_kernel_identity(x_ref, w0_ref, b0_ref, w1_ref, b1_ref, o_ref, *,
                              compute_dtype):
    """size_in == size_out: identity shortcut (residual add stays f32)."""
    x = x_ref[...]                                     # (tm, size_in) f32
    h0 = jnp.maximum(x, 0.0)
    net = jnp.dot(h0.astype(compute_dtype), w0_ref[...],
                  preferred_element_type=jnp.float32) + b0_ref[...]
    hn = jnp.maximum(net, 0.0)
    dx = jnp.dot(hn.astype(compute_dtype), w1_ref[...],
                 preferred_element_type=jnp.float32) + b1_ref[...]
    o_ref[...] = (x + dx).astype(o_ref.dtype)


# ----------------------------------------------------------------------------
# Wrapper
# ----------------------------------------------------------------------------
def _round_up(n, m):
    return ((n + m - 1) // m) * m


def _vmem_cap_bytes():
    """Generation-aware VMEM limit cap (75% of physical VMEM)."""
    try:
        return int(pltpu.get_tpu_info().vmem_capacity_bytes * 3 // 4)
    except Exception:
        return 48 * 2**20            # safe on v7x's 64 MiB VMEM


def resnet_block_fc(x, params, *, tm=512, compute_dtype=jnp.bfloat16,
                    out_dtype=None):
    """x: (N, size_in) float32; params: dict of (in, out)-layout weights/biases.

    tm is the row tile (512-1024 recommended for large N).
    """
    N, size_in = x.shape
    w0, b0 = params["w0"], params["b0"]          # (size_in, size_h), (1, size_h)
    w1, b1 = params["w1"], params["b1"]          # (size_h, size_out), (1, size_out)
    ws = params.get("ws")                        # (size_in, size_out) or None
    size_h = w0.shape[1]
    size_out = w1.shape[1]
    has_shortcut = ws is not None
    out_dtype = x.dtype if out_dtype is None else out_dtype

    # ---- row tiling: tm multiple of 16 (bf16 sublane packing) ---------------
    # Edge tile handled by Pallas (OOB rows undefined on read, dropped on
    # write; every output row depends only on its own input row -> safe).
    tm_eff = min(_round_up(tm, 16), _round_up(N, 16))
    grid = pl.cdiv(N, tm_eff)
    # v7x has 2 TensorCores; keep the "parallel" grid evenly divisible by 2.
    if grid > 1 and grid % 2 == 1:
        tm_eff = _round_up(pl.cdiv(N, grid + 1), 16)
        grid = pl.cdiv(N, tm_eff)

    # ---- small constant operands: weights bf16 (MXU), biases f32 (epilogue) -
    w0_c = w0.astype(compute_dtype)
    w1_c = w1.astype(compute_dtype)
    b0_c = b0.reshape(1, size_h).astype(jnp.float32)
    b1_c = b1.reshape(1, size_out).astype(jnp.float32)

    row = lambda i: (i, 0)
    full = lambda i: (0, 0)

    in_specs = [
        pl.BlockSpec((tm_eff, size_in), row),        # x row tile (f32, unpadded)
        pl.BlockSpec((size_in, size_h), full),       # W0 (constant across grid)
        pl.BlockSpec((1, size_h), full),             # b0
        pl.BlockSpec((size_h, size_out), full),      # W1
    ]
    args = [x, w0_c, b0_c, w1_c]
    if has_shortcut:
        in_specs.append(pl.BlockSpec((size_in, size_out), full))   # Ws
        args.append(ws.astype(compute_dtype))
        kernel = functools.partial(_resblock_kernel_shortcut,
                                   compute_dtype=compute_dtype)
    else:
        kernel = functools.partial(_resblock_kernel_identity,
                                   compute_dtype=compute_dtype)
    in_specs.append(pl.BlockSpec((1, size_out), full))             # b1
    args.append(b1_c)
    out_spec = pl.BlockSpec((tm_eff, size_out), row)

    # ---- VMEM budget (double-buffered tiles + weights + temporaries) --------
    bpe = jnp.dtype(compute_dtype).itemsize
    obpe = jnp.dtype(out_dtype).itemsize
    w_bytes = (size_in * size_h + size_h * size_out
               + (size_in * size_out if has_shortcut else 0)) * bpe
    vmem_need = (
        2 * tm_eff * size_in * 4                      # x tiles (f32)
        + 2 * tm_eff * size_out * obpe                # out tiles
        + 2 * w_bytes                                 # weights (double-buffered)
        + 2 * (size_h + size_out) * 4                 # biases
        + tm_eff * (size_in + size_h + size_out) * 6  # f32/bf16 temporaries
    )
    vmem_limit = int(min(max(2 * vmem_need, 16 * 2**20), _vmem_cap_bytes()))

    flops = 2 * N * (size_in * size_h + size_h * size_out
                     + (size_in * size_out if has_shortcut else 0))
    bytes_accessed = int(N * size_in * 4 + w_bytes
                         + (size_h + size_out) * 4 + N * size_out * obpe)

    return pl.pallas_call(
        kernel,
        out_shape=jax.ShapeDtypeStruct((N, size_out), out_dtype),
        grid_spec=pltpu.PrefetchScalarGridSpec(
            num_scalar_prefetch=0,
            grid=(grid,),
            in_specs=in_specs,
            out_specs=out_spec,
        ),
        compiler_params=pltpu.CompilerParams(
            dimension_semantics=("parallel",),
            vmem_limit_bytes=vmem_limit,
        ),
        cost_estimate=pl.CostEstimate(
            flops=int(flops), transcendentals=0,
            bytes_accessed=bytes_accessed),
    )(*args)


# ----------------------------------------------------------------------------
# Reference / init (mirrors the PyTorch module)
# ----------------------------------------------------------------------------
def init_params(key, size_in, size_out=None, size_h=None):
    """Deterministic synthetic init mirroring the PyTorch module's __init__."""
    if size_out is None:
        size_out = size_in
    if size_h is None:
        size_h = min(size_in, size_out)
    k0, k0b, k1b, ks = jax.random.split(key, 4)
    params = {
        "w0": jax.random.normal(k0, (size_in, size_h), jnp.float32) * 0.1,
        "b0": jax.random.normal(k0b, (1, size_h), jnp.float32) * 0.1,
        # fc_1.weight is zero-initialized in the module
        "w1": jnp.zeros((size_h, size_out), jnp.float32),
        "b1": jax.random.normal(k1b, (1, size_out), jnp.float32) * 0.1,
    }
    if size_in != size_out:
        params["ws"] = jax.random.normal(ks, (size_in, size_out), jnp.float32) * 0.1
    return params


def reference(x, params):
    h = jnp.maximum(x, 0.0)
    net = h @ params["w0"] + params["b0"]
    dx = jnp.maximum(net, 0.0) @ params["w1"] + params["b1"]
    x_s = x @ params["ws"] if "ws" in params else x
    return x_s + dx


# ----------------------------------------------------------------------------
if __name__ == "__main__":
    key = jax.random.PRNGKey(0)
    kx, kp1, kp2, kw1 = jax.random.split(key, 4)

    # 2 "batches" x 300 points = 600 rows -> grid of 2 (tm=512, even for v7x)
    n_batch, n_pts = 2, 300
    size_in, size_h, size_out = 32, 32, 48
    tol = dict(atol=2e-2, rtol=2e-2)   # bf16 dot operands, f32 epilogue/residual

    x = jax.random.normal(kx, (n_batch * n_pts, size_in), jnp.float32)

    # Case 1: size_in != size_out -> learned linear shortcut (two-dot kernel)
    params_sc = init_params(kp1, size_in, size_out, size_h)
    out_sc = jax.block_until_ready(resnet_block_fc(x, params_sc))
    assert out_sc.shape == (n_batch * n_pts, size_out)
    assert jnp.allclose(out_sc, reference(x, params_sc), **tol), "shortcut mismatch"

    # Case 1b: same block but with non-zero fc_1 weights ("trained" weights)
    params_tr = dict(params_sc)
    params_tr["w1"] = jax.random.normal(kw1, (size_h, size_out), jnp.float32) * 0.1
    out_tr = jax.block_until_ready(resnet_block_fc(x, params_tr))
    assert jnp.allclose(out_tr, reference(x, params_tr), **tol), "trained mismatch"

    # Case 2: size_in == size_out -> identity shortcut
    params_id = init_params(kp2, size_in)
    out_id = jax.block_until_ready(resnet_block_fc(x, params_id))
    assert out_id.shape == (n_batch * n_pts, size_in)
    assert jnp.allclose(out_id, reference(x, params_id), **tol), "identity mismatch"

    print("KERNEL_OK")
</pallas_src>

<mosaic_0001>
module attributes {stable_mosaic.version = 11 : i64} {
  func.func @_resblock_kernel_shortcut(%arg0: i32, %arg1: memref<512x32xf32, #tpu.memory_space<vmem>>, %arg2: memref<32x32xbf16, #tpu.memory_space<vmem>>, %arg3: memref<1x32xf32, #tpu.memory_space<vmem>>, %arg4: memref<32x48xbf16, #tpu.memory_space<vmem>>, %arg5: memref<32x48xbf16, #tpu.memory_space<vmem>>, %arg6: memref<1x48xf32, #tpu.memory_space<vmem>>, %arg7: memref<512x48xf32, #tpu.memory_space<vmem>>) attributes {dimension_semantics = [#tpu.dimension_semantics<parallel>], iteration_bounds = array<i64: 2>, scalar_prefetch = 0 : i64, scratch_operands = 0 : i64, tpu.core_type = #tpu.core_type<tc>, window_params = [{transform_indices = @transform_0, window_bounds = array<i64: 512, 32>}, {pipeline_mode = #tpu.pipeline_mode<synchronous>, transform_indices = @transform_1, window_bounds = array<i64: 32, 32>}, {pipeline_mode = #tpu.pipeline_mode<synchronous>, transform_indices = @transform_2, window_bounds = array<i64: 1, 32>}, {pipeline_mode = #tpu.pipeline_mode<synchronous>, transform_indices = @transform_3, window_bounds = array<i64: 32, 48>}, {pipeline_mode = #tpu.pipeline_mode<synchronous>, transform_indices = @transform_4, window_bounds = array<i64: 32, 48>}, {pipeline_mode = #tpu.pipeline_mode<synchronous>, transform_indices = @transform_5, window_bounds = array<i64: 1, 48>}, {transform_indices = @transform_6, window_bounds = array<i64: 512, 48>}]} {
    %c0 = arith.constant 0 : index
    %c0_0 = arith.constant 0 : index
    %0 = vector.load %arg1[%c0, %c0_0] : memref<512x32xf32, #tpu.memory_space<vmem>>, vector<512x32xf32>
    %cst = arith.constant 0.000000e+00 : f32
    %1 = vector.broadcast %cst : f32 to vector<512x32xf32>
    %2 = arith.maximumf %0, %1 : vector<512x32xf32>
    %3 = arith.truncf %2 : vector<512x32xf32> to vector<512x32xbf16>
    %c0_1 = arith.constant 0 : index
    %c0_2 = arith.constant 0 : index
    %4 = vector.load %arg2[%c0_1, %c0_2] : memref<32x32xbf16, #tpu.memory_space<vmem>>, vector<32x32xbf16>
    %cst_3 = arith.constant dense<0.000000e+00> : vector<512x32xf32>
    %5 = tpu.matmul %3, %4, %cst_3 {dimension_numbers = #tpu.dot_dimension_numbers<[1], [0], [0], [1], [0, 0, 1, 1], [], []>} : vector<512x32xbf16>, vector<32x32xbf16>, vector<512x32xf32> -> vector<512x32xf32>
    %c0_4 = arith.constant 0 : index
    %c0_5 = arith.constant 0 : index
    %6 = vector.load %arg3[%c0_4, %c0_5] : memref<1x32xf32, #tpu.memory_space<vmem>>, vector<1x32xf32>
    %7 = vector.broadcast %6 : vector<1x32xf32> to vector<512x32xf32>
    %8 = arith.addf %5, %7 : vector<512x32xf32>
    %cst_6 = arith.constant 0.000000e+00 : f32
    %9 = vector.broadcast %cst_6 : f32 to vector<512x32xf32>
    %10 = arith.maximumf %8, %9 : vector<512x32xf32>
    %11 = arith.truncf %10 : vector<512x32xf32> to vector<512x32xbf16>
    %c0_7 = arith.constant 0 : index
    %c0_8 = arith.constant 0 : index
    %12 = vector.load %arg4[%c0_7, %c0_8] : memref<32x48xbf16, #tpu.memory_space<vmem>>, vector<32x48xbf16>
    %cst_9 = arith.constant dense<0.000000e+00> : vector<512x48xf32>
    %13 = tpu.matmul %11, %12, %cst_9 {dimension_numbers = #tpu.dot_dimension_numbers<[1], [0], [0], [1], [0, 0, 1, 1], [], []>} : vector<512x32xbf16>, vector<32x48xbf16>, vector<512x48xf32> -> vector<512x48xf32>
    %14 = arith.truncf %0 : vector<512x32xf32> to vector<512x32xbf16>
    %c0_10 = arith.constant 0 : index
    %c0_11 = arith.constant 0 : index
    %15 = vector.load %arg5[%c0_10, %c0_11] : memref<32x48xbf16, #tpu.memory_space<vmem>>, vector<32x48xbf16>
    %cst_12 = arith.constant dense<0.000000e+00> : vector<512x48xf32>
    %16 = tpu.matmul %14, %15, %cst_12 {dimension_numbers = #tpu.dot_dimension_numbers<[1], [0], [0], [1], [0, 0, 1, 1], [], []>} : vector<512x32xbf16>, vector<32x48xbf16>, vector<512x48xf32> -> vector<512x48xf32>
    %17 = arith.addf %16, %13 : vector<512x48xf32>
    %c0_13 = arith.constant 0 : index
    %c0_14 = arith.constant 0 : index
    %18 = vector.load %arg6[%c0_13, %c0_14] : memref<1x48xf32, #tpu.memory_space<vmem>>, vector<1x48xf32>
    %19 = vector.broadcast %18 : vector<1x48xf32> to vector<512x48xf32>
    %20 = arith.addf %17, %19 : vector<512x48xf32>
    %c0_15 = arith.constant 0 : index
    %c0_16 = arith.constant 0 : index
    %21 = vector.load %arg7[%c0_15, %c0_16] : memref<512x48xf32, #tpu.memory_space<vmem>>, vector<512x48xf32>
    tpu.vector_store %arg7[%c0_15, %c0_16], %20 {strides = array<i32>} : memref<512x48xf32, #tpu.memory_space<vmem>>, vector<512x48xf32>,
    return
  }
  func.func @transform_0(%arg0: i32) -> (i32, i32) {
    %c0_i32 = arith.constant 0 : i32
    %c0_i32_0 = arith.constant 0 : i32
    return %arg0, %c0_i32 : i32, i32
  }
  func.func @transform_1(%arg0: i32) -> (i32, i32) {
    %c0_i32 = arith.constant 0 : i32
    %c0_i32_0 = arith.constant 0 : i32
    %c0_i32_1 = arith.constant 0 : i32
    return %c0_i32, %c0_i32_0 : i32, i32
  }
  func.func @transform_2(%arg0: i32) -> (i32, i32) {
    %c0_i32 = arith.constant 0 : i32
    %c0_i32_0 = arith.constant 0 : i32
    %c0_i32_1 = arith.constant 0 : i32
    return %c0_i32, %c0_i32_0 : i32, i32
  }
  func.func @transform_3(%arg0: i32) -> (i32, i32) {
    %c0_i32 = arith.constant 0 : i32
    %c0_i32_0 = arith.constant 0 : i32
    %c0_i32_1 = arith.constant 0 : i32
    return %c0_i32, %c0_i32_0 : i32, i32
  }
  func.func @transform_4(%arg0: i32) -> (i32, i32) {
    %c0_i32 = arith.constant 0 : i32
    %c0_i32_0 = arith.constant 0 : i32
    %c0_i32_1 = arith.constant 0 : i32
    return %c0_i32, %c0_i32_0 : i32, i32
  }
  func.func @transform_5(%arg0: i32) -> (i32, i32) {
    %c0_i32 = arith.constant 0 : i32
    %c0_i32_0 = arith.constant 0 : i32
    %c0_i32_1 = arith.constant 0 : i32
    return %c0_i32, %c0_i32_0 : i32, i32
  }
  func.func @transform_6(%arg0: i32) -> (i32, i32) {
    %c0_i32 = arith.constant 0 : i32
    %c0_i32_0 = arith.constant 0 : i32
    return %arg0, %c0_i32 : i32, i32
  }
}

</mosaic_0001>

<llo_original>
// kernel: tpu_custom_call.1
$region0: #{tpu_custom_call.1}
  #allocation0 [shape = 'u32[]', space=smem, size = 0x4, offset = 0x4, fixed_abs, tag = 'smem constant byte address 0x4 - core index']
  #allocation1 [shape = 'u32[72,128]{1,0:T(1,128)}', space=vmem, size = 0x9000, scoped, tag = 'internal scratch']
  %s0 = inlined_call_operand.vmem [shape: f32[600,32], index: 0, kind: input, shape index: {}]
  %s1 = inlined_call_operand.vmem [shape: bf16[32,32], index: 1, kind: input, shape index: {}]
  %s2 = inlined_call_operand.vmem [shape: f32[1,32], index: 2, kind: input, shape index: {}]
  %s3 = inlined_call_operand.vmem [shape: bf16[32,48], index: 3, kind: input, shape index: {}]
  %s4 = inlined_call_operand.vmem [shape: bf16[32,48], index: 4, kind: input, shape index: {}]
  %s5 = inlined_call_operand.vmem [shape: f32[1,48], index: 5, kind: input, shape index: {}]
  %s6 = inlined_call_operand.vmem [shape: f32[600,48], index: 6, kind: output, shape index: {}]
  %s7 = sld [smem:[#allocation0]]
  $region105: #{tpu_custom_call.1} parent=0
    _
  %s9 = ssub.s32 1, %s7
  %s10 = scalar_select 0, %s9, %s7
  $region1: #{tpu_custom_call.1} parent=0
    #allocation2 [shape = 'u8[524288]{0}', space=vmem, size = 0x80000, scoped, tag = 'output window, operand 0']
    loop: start=0, step=1, limit=4
    $region2: #{tpu_custom_call.1} parent=1 // loop_pre_header
      _
    $region3: #{tpu_custom_call.1} parent=1 // loop_header
      %s12 = sphi 0, %s16
      %p13 = scmp.ge.s32.totalorder %s12, 4
      %s22 = sphi 0, %s24
      %s25 = sphi 0, %s22
      %s26 = sphi 0, %s25
      %s42 = sphi 0, %s26
      %s46 = sphi 0, %s46
      %s48 = sphi 0, %s46
      %s49 = sphi 0, %s48
      %s63 = sphi 0, %s49
      %s67 = sphi 0, %s67
      %s69 = sphi 0, %s67
      %s70 = sphi 0, %s69
      %s84 = sphi 0, %s70
      %s88 = sphi 0, %s88
      %s90 = sphi 0, %s88
      %s91 = sphi 0, %s90
      %s105 = sphi 0, %s91
      %s109 = sphi 0, %s109
      %s111 = sphi 0, %s109
      %s112 = sphi 0, %s111
      %s126 = sphi 0, %s112
      %s130 = sphi 0, %s130
      %s132 = sphi 0, %s130
      %s133 = sphi 0, %s132
      %s147 = sphi 0, %s133
      %s153 = sphi 0, %s155
      %s156 = sphi 0, %s153
      %s157 = sphi 0, %s156
      %s173 = sphi 0, %s157
    $region4: #{tpu_custom_call.1} parent=1 // loop_header_branch
      %15 = sbr.rel (%p13) target = $region8
    $region5: #{tpu_custom_call.1} parent=1 // loop_body
      %s17 = ssub.s32 %s12, 1
      %s18 = ssub.s32 %s12, 2
      %s19 = sadd.s32 %s12, 1
      %s20 = ssub.s32 %s12, %s19
      %p21 = scmp.eq.s32.totalorder %s20, 0
      %s23 = sadd.s32 %s22, 1
      %s24 = scalar_select %p21, %s22, %s23
      %p27 = pneg %p21
      %p28 = scmp.eq.s32.totalorder %s12, 1
      %p29 = por %p27, %p28
      %p30 = scmp.ne.s32.totalorder %s22, %s25
      %p31 = scmp.eq.s32.totalorder %s12, 0
      %p32 = por %p30, %p31
      %p33 = scmp.ne.s32.totalorder %s22, %s25
      %p34 = scmp.eq.s32.totalorder %s17, 1
      %p35 = por %p33, %p34
      %p36 = scmp.ne.s32.totalorder %s25, %s26
      %p37 = scmp.eq.s32.totalorder %s17, 0
      %p38 = por %p36, %p37
      %p39 = scmp.ne.s32.totalorder %s25, %s26
      %p40 = scmp.eq.s32.totalorder %s18, 1
      %p41 = por %p39, %p40
      %p43 = scmp.ne.s32.totalorder %s26, %s42
      %p44 = scmp.eq.s32.totalorder %s18, 0
      %p45 = por %p43, %p44
      %s47 = sadd.s32 %s46, 1
      %p50 = scmp.eq.s32.totalorder %s12, 1
      %p51 = scmp.ne.s32.totalorder %s46, %s48
      %p52 = scmp.eq.s32.totalorder %s12, 0
      %p53 = por %p51, %p52
      %p54 = scmp.ne.s32.totalorder %s46, %s48
      %p55 = scmp.eq.s32.totalorder %s17, 1
      %p56 = por %p54, %p55
      %p57 = scmp.ne.s32.totalorder %s48, %s49
      %p58 = scmp.eq.s32.totalorder %s17, 0
      %p59 = por %p57, %p58
      %p60 = scmp.ne.s32.totalorder %s48, %s49
      %p61 = scmp.eq.s32.totalorder %s18, 1
      %p62 = por %p60, %p61
      %p64 = scmp.ne.s32.totalorder %s49, %s63
      %p65 = scmp.eq.s32.totalorder %s18, 0
      %p66 = por %p64, %p65
      %s68 = sadd.s32 %s67, 1
      %p71 = scmp.eq.s32.totalorder %s12, 1
      %p72 = scmp.ne.s32.totalorder %s67, %s69
      %p73 = scmp.eq.s32.totalorder %s12, 0
      %p74 = por %p72, %p73
      %p75 = scmp.ne.s32.totalorder %s67, %s69
      %p76 = scmp.eq.s32.totalorder %s17, 1
      %p77 = por %p75, %p76
      %p78 = scmp.ne.s32.totalorder %s69, %s70
      %p79 = scmp.eq.s32.totalorder %s17, 0
      %p80 = por %p78, %p79
      %p81 = scmp.ne.s32.totalorder %s69, %s70
      %p82 = scmp.eq.s32.totalorder %s18, 1
      %p83 = por %p81, %p82
      %p85 = scmp.ne.s32.totalorder %s70, %s84
      %p86 = scmp.eq.s32.totalorder %s18, 0
      %p87 = por %p85, %p86
      %s89 = sadd.s32 %s88, 1
      %p92 = scmp.eq.s32.totalorder %s12, 1
      %p93 = scmp.ne.s32.totalorder %s88, %s90
      %p94 = scmp.eq.s32.totalorder %s12, 0
      %p95 = por %p93, %p94
      %p96 = scmp.ne.s32.totalorder %s88, %s90
      %p97 = scmp.eq.s32.totalorder %s17, 1
      %p98 = por %p96, %p97
      %p99 = scmp.ne.s32.totalorder %s90, %s91
      %p100 = scmp.eq.s32.totalorder %s17, 0
      %p101 = por %p99, %p100
      %p102 = scmp.ne.s32.totalorder %s90, %s91
      %p103 = scmp.eq.s32.totalorder %s18, 1
      %p104 = por %p102, %p103
      %p106 = scmp.ne.s32.totalorder %s91, %s105
      %p107 = scmp.eq.s32.totalorder %s18, 0
      %p108 = por %p106, %p107
      %s110 = sadd.s32 %s109, 1
      %p113 = scmp.eq.s32.totalorder %s12, 1
      %p114 = scmp.ne.s32.totalorder %s109, %s111
      %p115 = scmp.eq.s32.totalorder %s12, 0
      %p116 = por %p114, %p115
      %p117 = scmp.ne.s32.totalorder %s109, %s111
      %p118 = scmp.eq.s32.totalorder %s17, 1
      %p119 = por %p117, %p118
      %p120 = scmp.ne.s32.totalorder %s111, %s112
      %p121 = scmp.eq.s32.totalorder %s17, 0
      %p122 = por %p120, %p121
      %p123 = scmp.ne.s32.totalorder %s111, %s112
      %p124 = scmp.eq.s32.totalorder %s18, 1
      %p125 = por %p123, %p124
      %p127 = scmp.ne.s32.totalorder %s112, %s126
      %p128 = scmp.eq.s32.totalorder %s18, 0
      %p129 = por %p127, %p128
      %s131 = sadd.s32 %s130, 1
      %p134 = scmp.eq.s32.totalorder %s12, 1
      %p135 = scmp.ne.s32.totalorder %s130, %s132
      %p136 = scmp.eq.s32.totalorder %s12, 0
      %p137 = por %p135, %p136
      %p138 = scmp.ne.s32.totalorder %s130, %s132
      %p139 = scmp.eq.s32.totalorder %s17, 1
      %p140 = por %p138, %p139
      %p141 = scmp.ne.s32.totalorder %s132, %s133
      %p142 = scmp.eq.s32.totalorder %s17, 0
      %p143 = por %p141, %p142
      %p144 = scmp.ne.s32.totalorder %s132, %s133
      %p145 = scmp.eq.s32.totalorder %s18, 1
      %p146 = por %p144, %p145
      %p148 = scmp.ne.s32.totalorder %s133, %s147
      %p149 = scmp.eq.s32.totalorder %s18, 0
      %p150 = por %p148, %p149
      %s151 = ssub.s32 %s12, %s19
      %p152 = scmp.eq.s32.totalorder %s151, 0
      %s154 = sadd.s32 %s153, 1
      %s155 = scalar_select %p152, %s153, %s154
      %p158 = pneg %p152
      %p159 = scmp.eq.s32.totalorder %s12, 1
      %p160 = por %p158, %p159
      %p161 = scmp.ne.s32.totalorder %s153, %s156
      %p162 = scmp.eq.s32.totalorder %s12, 0
      %p163 = por %p161, %p162
      %p164 = scmp.ne.s32.totalorder %s153, %s156
      %p165 = scmp.eq.s32.totalorder %s17, 1
      %p166 = por %p164, %p165
      %p167 = scmp.ne.s32.totalorder %s156, %s157
      %p168 = scmp.eq.s32.totalorder %s17, 0
      %p169 = por %p167, %p168
      %p170 = scmp.ne.s32.totalorder %s156, %s157
      %p171 = scmp.eq.s32.totalorder %s18, 1
      %p172 = por %p170, %p171
      %p174 = scmp.ne.s32.totalorder %s157, %s173
      %p175 = scmp.eq.s32.totalorder %s18, 0
      %p176 = por %p174, %p175
      %p177 = scmp.le.s32.totalorder 1, %s12
      %p178 = scmp.lt.s32.totalorder %s12, 3
      %p179 = pnand %p177, %p178
      %p180 = pneg %p179
      // Predicated region
      $region9: #{tpu_custom_call.1} parent=5 // pred_check
        _
      $region10: #{tpu_custom_call.1} parent=5 // pred_check_branch
        %182 = sbr.rel (%p179) target = $region12
      $region11: #{tpu_custom_call.1} parent=5 // pred_region
        %s183 = ssub.s32 %s12, 1
        // Predicated region
        $region13: #{tpu_custom_call.1} parent=11 // pred_check
          %p184 = pneg %p59
        $region14: #{tpu_custom_call.1} parent=11 // pred_check_branch
          %186 = sbr.rel (%p184) target = $region16
        $region15: #{tpu_custom_call.1} parent=11 // pred_region
          _
        $region16: #{tpu_custom_call.1} parent=11 // pred_fallthru
          _
        // Predicated region
        $region17: #{tpu_custom_call.1} parent=11 // pred_check
          %p187 = pneg %p80
        $region18: #{tpu_custom_call.1} parent=11 // pred_check_branch
          %189 = sbr.rel (%p187) target = $region20
        $region19: #{tpu_custom_call.1} parent=11 // pred_region
          _
        $region20: #{tpu_custom_call.1} parent=11 // pred_fallthru
          _
        // Predicated region
        $region21: #{tpu_custom_call.1} parent=11 // pred_check
          %p190 = pneg %p101
        $region22: #{tpu_custom_call.1} parent=11 // pred_check_branch
          %192 = sbr.rel (%p190) target = $region24
        $region23: #{tpu_custom_call.1} parent=11 // pred_region
          _
        $region24: #{tpu_custom_call.1} parent=11 // pred_fallthru
          _
        // Predicated region
        $region25: #{tpu_custom_call.1} parent=11 // pred_check
          %p193 = pneg %p122
        $region26: #{tpu_custom_call.1} parent=11 // pred_check_branch
          %195 = sbr.rel (%p193) target = $region28
        $region27: #{tpu_custom_call.1} parent=11 // pred_region
          _
        $region28: #{tpu_custom_call.1} parent=11 // pred_fallthru
          _
        // Predicated region
        $region29: #{tpu_custom_call.1} parent=11 // pred_check
          %p196 = pneg %p143
        $region30: #{tpu_custom_call.1} parent=11 // pred_check_branch
          %198 = sbr.rel (%p196) target = $region32
        $region31: #{tpu_custom_call.1} parent=11 // pred_region
          _
        $region32: #{tpu_custom_call.1} parent=11 // pred_fallthru
          _
      $region12: #{tpu_custom_call.1} parent=5 // pred_fallthru
        _
      %p199 = scmp.lt.s32.totalorder %s12, 2
      // Predicated region
      $region33: #{tpu_custom_call.1} parent=5 // pred_check
        %p200 = pneg %p199
      $region34: #{tpu_custom_call.1} parent=5 // pred_check_branch
        %202 = sbr.rel (%p200) target = $region36
      $region35: #{tpu_custom_call.1} parent=5 // pred_region
        // Predicated region
        $region37: #{tpu_custom_call.1} parent=35 // pred_check
          %p203 = pneg %p32
        $region38: #{tpu_custom_call.1} parent=35 // pred_check_branch
          %205 = sbr.rel (%p203) target = $region40
        $region39: #{tpu_custom_call.1} parent=35 // pred_region
          %s206 = smul.u32 64, %s12
          %s207 = ssub.s32 75, %s206
          %p208 = scmp.lt.s32.totalorder %s207, 64
          %s209 = scalar_select %p208, %s207, 64
          %s210 = smul.u32 8, %s209
          %p211 = scmp.lt.s32.totalorder %s206, 74
          %s212 = scalar_select %p211, %s206, 74
          %s213 = smul.addr %s212, 8
          %s214 = scalar_lea.vmem %s0, %s213
          %s215 = smul.u32 64, %s12
          %s216 = ssub.s32 75, %s215
          %p217 = scmp.lt.s32.totalorder %s216, 64
          %s218 = scalar_select %p217, %s216, 64
          %s219 = smul.u32 8, %s218
        $region40: #{tpu_custom_call.1} parent=35 // pred_fallthru
          _
      $region36: #{tpu_custom_call.1} parent=5 // pred_fallthru
        _
      %p220 = scmp.le.s32.totalorder 1, %s12
      %p221 = scmp.lt.s32.totalorder %s12, 3
      %p222 = pnand %p220, %p221
      %p223 = pneg %p222
      // Predicated region
      $region41: #{tpu_custom_call.1} parent=5 // pred_check
        _
      $region42: #{tpu_custom_call.1} parent=5 // pred_check_branch
        %225 = sbr.rel (%p222) target = $region44
      $region43: #{tpu_custom_call.1} parent=5 // pred_region
        %s226 = ssub.s32 %s12, 1
        %s227 = smul.u32 64, %s17
        %s228 = ssub.s32 75, %s227
        %p229 = scmp.lt.s32.totalorder %s228, 64
        %s230 = scalar_select %p229, %s228, 64
        %s231 = smul.u32 8, %s230
        %p232 = scmp.lt.s32.totalorder %s227, 74
        %s233 = scalar_select %p232, %s227, 74
        %s234 = smul.addr %s233, 8
        %s235 = scalar_lea.vmem %s0, %s234
        %p236 = pneg %p38
        %p237 = pneg %p35
        %p238 = pneg %p59
        %p239 = pneg %p56
        %p240 = pneg %p80
        %p241 = pneg %p77
        %p242 = pneg %p101
        %p243 = pneg %p98
        %p244 = pneg %p122
        %p245 = pneg %p119
        %p246 = pneg %p143
        %p247 = pneg %p140
        %p248 = pneg %p169
        %p249 = pneg %p166
        %s250 = sand.u32 %s156, 1
        %s251 = sand.u32 %s156, 1
        %s252 = smul.addr %s251, 512
        %s253 = scalar_lea.vmem [#allocation2], %s252
        %s254 = smul.u32 64, %s17
        %s255 = ssub.s32 75, %s254
        %p256 = scmp.lt.s32.totalorder %s255, 64
        %s257 = scalar_select %p256, %s255, 64
        %s258 = smul.u32 8, %s257
        %p259 = scmp.lt.s32.totalorder %s254, 74
        %s260 = scalar_select %p259, %s254, 74
        %s261 = smul.addr %s260, 8
        %s262 = scalar_lea.vmem %s0, %s261
        %s263 = smul.u32 64, %s17
        %s264 = ssub.s32 75, %s263
        %p265 = scmp.lt.s32.totalorder %s264, 64
        %s266 = scalar_select %p265, %s264, 64
        %s267 = smul.u32 8, %s266
        %s268 = smul.u32 64, %s17
        %s269 = ssub.s32 75, %s268
        %p270 = scmp.lt.s32.totalorder %s269, 64
        %s271 = scalar_select %p270, %s269, 64
        %s272 = smul.u32 8, %s271
        %v274 = vld [vmem:[%s262] sm:$0xff]
        %v275 = vld [vmem:[%s262 + $0x8] sm:$0xff]
        %v276 = vld [vmem:[%s262 + $0x10] sm:$0xff]
        %v277 = vld [vmem:[%s262 + $0x18] sm:$0xff]
        %v278 = vld [vmem:[%s262 + $0x20] sm:$0xff]
        %v279 = vld [vmem:[%s262 + $0x28] sm:$0xff]
        %v280 = vld [vmem:[%s262 + $0x30] sm:$0xff]
        %v281 = vld [vmem:[%s262 + $0x38] sm:$0xff]
        %v282 = vld [vmem:[%s262 + $0x40] sm:$0xff]
        %v283 = vld [vmem:[%s262 + $0x48] sm:$0xff]
        %v284 = vld [vmem:[%s262 + $0x50] sm:$0xff]
        %v285 = vld [vmem:[%s262 + $0x58] sm:$0xff]
        %v286 = vld [vmem:[%s262 + $0x60] sm:$0xff]
        %v287 = vld [vmem:[%s262 + $0x68] sm:$0xff]
        %v288 = vld [vmem:[%s262 + $0x70] sm:$0xff]
        %v289 = vld [vmem:[%s262 + $0x78] sm:$0xff]
        %v290 = vld [vmem:[%s262 + $0x80] sm:$0xff]
        %v291 = vld [vmem:[%s262 + $0x88] sm:$0xff]
        %v292 = vld [vmem:[%s262 + $0x90] sm:$0xff]
        %v293 = vld [vmem:[%s262 + $0x98] sm:$0xff]
        %v294 = vld [vmem:[%s262 + $0xa0] sm:$0xff]
        %v295 = vld [vmem:[%s262 + $0xa8] sm:$0xff]
        %v296 = vld [vmem:[%s262 + $0xb0] sm:$0xff]
        %v297 = vld [vmem:[%s262 + $0xb8] sm:$0xff]
        %v298 = vld [vmem:[%s262 + $0xc0] sm:$0xff]
        %v299 = vld [vmem:[%s262 + $0xc8] sm:$0xff]
        %v300 = vld [vmem:[%s262 + $0xd0] sm:$0xff]
        %v301 = vld [vmem:[%s262 + $0xd8] sm:$0xff]
        %v302 = vld [vmem:[%s262 + $0xe0] sm:$0xff]
        %v303 = vld [vmem:[%s262 + $0xe8] sm:$0xff]
        %v304 = vld [vmem:[%s262 + $0xf0] sm:$0xff]
        %v305 = vld [vmem:[%s262 + $0xf8] sm:$0xff]
        %v306 = vld [vmem:[%s262 + $0x100] sm:$0xff]
        %v307 = vld [vmem:[%s262 + $0x108] sm:$0xff]
        %v308 = vld [vmem:[%s262 + $0x110] sm:$0xff]
        %v309 = vld [vmem:[%s262 + $0x118] sm:$0xff]
        %v310 = vld [vmem:[%s262 + $0x120] sm:$0xff]
        %v311 = vld [vmem:[%s262 + $0x128] sm:$0xff]
        %v312 = vld [vmem:[%s262 + $0x130] sm:$0xff]
        %v313 = vld [vmem:[%s262 + $0x138] sm:$0xff]
        %v314 = vld [vmem:[%s262 + $0x140] sm:$0xff]
        %v315 = vld [vmem:[%s262 + $0x148] sm:$0xff]
        %v316 = vld [vmem:[%s262 + $0x150] sm:$0xff]
        %v317 = vld [vmem:[%s262 + $0x158] sm:$0xff]
        %v318 = vld [vmem:[%s262 + $0x160] sm:$0xff]
        %v319 = vld [vmem:[%s262 + $0x168] sm:$0xff]
        %v320 = vld [vmem:[%s262 + $0x170] sm:$0xff]
        %v321 = vld [vmem:[%s262 + $0x178] sm:$0xff]
        %v322 = vld [vmem:[%s262 + $0x180] sm:$0xff]
        %v323 = vld [vmem:[%s262 + $0x188] sm:$0xff]
        %v324 = vld [vmem:[%s262 + $0x190] sm:$0xff]
        %v325 = vld [vmem:[%s262 + $0x198] sm:$0xff]
        %v326 = vld [vmem:[%s262 + $0x1a0] sm:$0xff]
        %v327 = vld [vmem:[%s262 + $0x1a8] sm:$0xff]
        %v328 = vld [vmem:[%s262 + $0x1b0] sm:$0xff]
        %v329 = vld [vmem:[%s262 + $0x1b8] sm:$0xff]
        %v330 = vld [vmem:[%s262 + $0x1c0] sm:$0xff]
        %v331 = vld [vmem:[%s262 + $0x1c8] sm:$0xff]
        %v332 = vld [vmem:[%s262 + $0x1d0] sm:$0xff]
        %v333 = vld [vmem:[%s262 + $0x1d8] sm:$0xff]
        %v334 = vld [vmem:[%s262 + $0x1e0] sm:$0xff]
        %v335 = vld [vmem:[%s262 + $0x1e8] sm:$0xff]
        %v336 = vld [vmem:[%s262 + $0x1f0] sm:$0xff]
        %v337 = vld [vmem:[%s262 + $0x1f8] sm:$0xff]
        %v338 = vmax.f32 %v274, 0.0
        %v339 = vmax.f32 %v275, 0.0
        %v340 = vmax.f32 %v276, 0.0
        %v341 = vmax.f32 %v277, 0.0
        %v342 = vmax.f32 %v278, 0.0
        %v343 = vmax.f32 %v279, 0.0
        %v344 = vmax.f32 %v280, 0.0
        %v345 = vmax.f32 %v281, 0.0
        %v346 = vmax.f32 %v282, 0.0
        %v347 = vmax.f32 %v283, 0.0
        %v348 = vmax.f32 %v284, 0.0
        %v349 = vmax.f32 %v285, 0.0
        %v350 = vmax.f32 %v286, 0.0
        %v351 = vmax.f32 %v287, 0.0
        %v352 = vmax.f32 %v288, 0.0
        %v353 = vmax.f32 %v289, 0.0
        %v354 = vmax.f32 %v290, 0.0
        %v355 = vmax.f32 %v291, 0.0
        %v356 = vmax.f32 %v292, 0.0
        %v357 = vmax.f32 %v293, 0.0
        %v358 = vmax.f32 %v294, 0.0
        %v359 = vmax.f32 %v295, 0.0
        %v360 = vmax.f32 %v296, 0.0
        %v361 = vmax.f32 %v297, 0.0
        %v362 = vmax.f32 %v298, 0.0
        %v363 = vmax.f32 %v299, 0.0
        %v364 = vmax.f32 %v300, 0.0
        %v365 = vmax.f32 %v301, 0.0
        %v366 = vmax.f32 %v302, 0.0
        %v367 = vmax.f32 %v303, 0.0
        %v368 = vmax.f32 %v304, 0.0
        %v369 = vmax.f32 %v305, 0.0
        %v370 = vmax.f32 %v306, 0.0
        %v371 = vmax.f32 %v307, 0.0
        %v372 = vmax.f32 %v308, 0.0
        %v373 = vmax.f32 %v309, 0.0
        %v374 = vmax.f32 %v310, 0.0
        %v375 = vmax.f32 %v311, 0.0
        %v376 = vmax.f32 %v312, 0.0
        %v377 = vmax.f32 %v313, 0.0
        %v378 = vmax.f32 %v314, 0.0
        %v379 = vmax.f32 %v315, 0.0
        %v380 = vmax.f32 %v316, 0.0
        %v381 = vmax.f32 %v317, 0.0
        %v382 = vmax.f32 %v318, 0.0
        %v383 = vmax.f32 %v319, 0.0
        %v384 = vmax.f32 %v320, 0.0
        %v385 = vmax.f32 %v321, 0.0
        %v386 = vmax.f32 %v322, 0.0
        %v387 = vmax.f32 %v323, 0.0
        %v388 = vmax.f32 %v324, 0.0
        %v389 = vmax.f32 %v325, 0.0
        %v390 = vmax.f32 %v326, 0.0
        %v391 = vmax.f32 %v327, 0.0
        %v392 = vmax.f32 %v328, 0.0
        %v393 = vmax.f32 %v329, 0.0
        %v394 = vmax.f32 %v330, 0.0
        %v395 = vmax.f32 %v331, 0.0
        %v396 = vmax.f32 %v332, 0.0
        %v397 = vmax.f32 %v333, 0.0
        %v398 = vmax.f32 %v334, 0.0
        %v399 = vmax.f32 %v335, 0.0
        %v400 = vmax.f32 %v336, 0.0
        %v401 = vmax.f32 %v337, 0.0
        %v402 = vpack.c.bf16 %v339, %v338
        %v403 = vpack.c.bf16 %v341, %v340
        %v404 = vpack.c.bf16 %v343, %v342
        %v405 = vpack.c.bf16 %v345, %v344
        %v406 = vpack.c.bf16 %v347, %v346
        %v407 = vpack.c.bf16 %v349, %v348
        %v408 = vpack.c.bf16 %v351, %v350
        %v409 = vpack.c.bf16 %v353, %v352
        %v410 = vpack.c.bf16 %v355, %v354
        %v411 = vpack.c.bf16 %v357, %v356
        %v412 = vpack.c.bf16 %v359, %v358
        %v413 = vpack.c.bf16 %v361, %v360
        %v414 = vpack.c.bf16 %v363, %v362
        %v415 = vpack.c.bf16 %v365, %v364
        %v416 = vpack.c.bf16 %v367, %v366
        %v417 = vpack.c.bf16 %v369, %v368
        %v418 = vpack.c.bf16 %v371, %v370
        %v419 = vpack.c.bf16 %v373, %v372
        %v420 = vpack.c.bf16 %v375, %v374
        %v421 = vpack.c.bf16 %v377, %v376
        %v422 = vpack.c.bf16 %v379, %v378
        %v423 = vpack.c.bf16 %v381, %v380
        %v424 = vpack.c.bf16 %v383, %v382
        %v425 = vpack.c.bf16 %v385, %v384
        %v426 = vpack.c.bf16 %v387, %v386
        %v427 = vpack.c.bf16 %v389, %v388
        %v428 = vpack.c.bf16 %v391, %v390
        %v429 = vpack.c.bf16 %v393, %v392
        %v430 = vpack.c.bf16 %v395, %v394
        %v431 = vpack.c.bf16 %v397, %v396
        %v432 = vpack.c.bf16 %v399, %v398
        %v433 = vpack.c.bf16 %v401, %v400
        %v434 = vld [vmem:[%s1] sm:$0xf]
        %v435 = vld [vmem:[%s1 + $0x4] sm:$0xf]
        %v436 = vld [vmem:[%s1 + $0x8] sm:$0xf]
        %v437 = vld [vmem:[%s1 + $0xc] sm:$0xf]
        %v438 = vld [vmem:[%s2] sm:$0x1]
        %v440 = vperm.slane %v438, 0
        %v446 = vunpack.c.l.b16 %v434
        %v447 = vunpack.c.l.b16 %v435
        %v448 = vunpack.c.l.b16 %v436
        %v449 = vunpack.c.l.b16 %v437
        %v450 = vpack.c.b16 %v447, %v446
        %v451 = vpack.c.b16 %v449, %v448
        %vm454 = vcmask 261120
        %v456 = vsel %vm454, %v402, 0
        %v459 = vsel %vm454, %v403, 0
        %v462 = vsel %vm454, %v404, 0
        %v465 = vsel %vm454, %v405, 0
        %v468 = vsel %vm454, %v406, 0
        %v471 = vsel %vm454, %v407, 0
        %v474 = vsel %vm454, %v408, 0
        %v477 = vsel %vm454, %v409, 0
        %v480 = vsel %vm454, %v410, 0
        %v483 = vsel %vm454, %v411, 0
        %v486 = vsel %vm454, %v412, 0
        %v489 = vsel %vm454, %v413, 0
        %v492 = vsel %vm454, %v414, 0
        %v495 = vsel %vm454, %v415, 0
        %v498 = vsel %vm454, %v416, 0
        %v501 = vsel %vm454, %v417, 0
        %v504 = vsel %vm454, %v418, 0
        %v507 = vsel %vm454, %v419, 0
        %v510 = vsel %vm454, %v420, 0
        %v513 = vsel %vm454, %v421, 0
        %v516 = vsel %vm454, %v422, 0
        %v519 = vsel %vm454, %v423, 0
        %v522 = vsel %vm454, %v424, 0
        %v525 = vsel %vm454, %v425, 0
        %v528 = vsel %vm454, %v426, 0
        %v531 = vsel %vm454, %v427, 0
        %v534 = vsel %vm454, %v428, 0
        %v537 = vsel %vm454, %v429, 0
        %v540 = vsel %vm454, %v430, 0
        %v543 = vsel %vm454, %v431, 0
        %v546 = vsel %vm454, %v432, 0
        %v549 = vsel %vm454, %v433, 0
        %551 = vmatpush.bf16.msra.mxu0 0
        %552 = vmatpush.bf16.msra.mxu0 0
        %553 = vmatpush.bf16.msra.mxu0 0
        %554 = vmatpush.bf16.msra.mxu0 0
        %555 = vmatpush.bf16.msra.mxu0 0
        %556 = vmatpush.bf16.msra.mxu0 0
        %557 = vmatpush.bf16.msra.mxu0 %v451
        %558 = vmatpush.bf16.msra.mxu0 %v450
        %559 = vmatmul.bf16.gmra.mxu0 %v456
        %v560 = vpop.f32.mrf.mxu0
        %v561 = vadd.f32 %v440, %v560
        %v562 = vpop.f32.mrf.mxu0
        %v563 = vadd.f32 %v440, %v562
        %564 = vmatmul.bf16.gmra.mxu0 %v459
        %v565 = vpop.f32.mrf.mxu0
        %v566 = vadd.f32 %v440, %v565
        %v567 = vpop.f32.mrf.mxu0
        %v568 = vadd.f32 %v440, %v567
        %569 = vmatmul.bf16.gmra.mxu0 %v462
        %v570 = vpop.f32.mrf.mxu0
        %v571 = vadd.f32 %v440, %v570
        %v572 = vpop.f32.mrf.mxu0
        %v573 = vadd.f32 %v440, %v572
        %574 = vmatmul.bf16.gmra.mxu0 %v465
        %v575 = vpop.f32.mrf.mxu0
        %v576 = vadd.f32 %v440, %v575
        %v577 = vpop.f32.mrf.mxu0
        %v578 = vadd.f32 %v440, %v577
        %579 = vmatmul.bf16.gmra.mxu0 %v468
        %v580 = vpop.f32.mrf.mxu0
        %v581 = vadd.f32 %v440, %v580
        %v582 = vpop.f32.mrf.mxu0
        %v583 = vadd.f32 %v440, %v582
        %584 = vmatmul.bf16.gmra.mxu0 %v471
        %v585 = vpop.f32.mrf.mxu0
        %v586 = vadd.f32 %v440, %v585
        %v587 = vpop.f32.mrf.mxu0
        %v588 = vadd.f32 %v440, %v587
        %589 = vmatmul.bf16.gmra.mxu0 %v474
        %v590 = vpop.f32.mrf.mxu0
        %v591 = vadd.f32 %v440, %v590
        %v592 = vpop.f32.mrf.mxu0
        %v593 = vadd.f32 %v440, %v592
        %594 = vmatmul.bf16.gmra.mxu0 %v477
        %v595 = vpop.f32.mrf.mxu0
        %v596 = vadd.f32 %v440, %v595
        %v597 = vpop.f32.mrf.mxu0
        %v598 = vadd.f32 %v440, %v597
        %599 = vmatmul.bf16.gmra.mxu0 %v480
        %v600 = vpop.f32.mrf.mxu0
        %v601 = vadd.f32 %v440, %v600
        %v602 = vpop.f32.mrf.mxu0
        %v603 = vadd.f32 %v440, %v602
        %604 = vmatmul.bf16.gmra.mxu0 %v483
        %v605 = vpop.f32.mrf.mxu0
        %v606 = vadd.f32 %v440, %v605
        %v607 = vpop.f32.mrf.mxu0
        %v608 = vadd.f32 %v440, %v607
        %609 = vmatmul.bf16.gmra.mxu0 %v486
        %v610 = vpop.f32.mrf.mxu0
        %v611 = vadd.f32 %v440, %v610
        %v612 = vpop.f32.mrf.mxu0
        %v613 = vadd.f32 %v440, %v612
        %614 = vmatmul.bf16.gmra.mxu0 %v489
        %v615 = vpop.f32.mrf.mxu0
        %v616 = vadd.f32 %v440, %v615
        %v617 = vpop.f32.mrf.mxu0
        %v618 = vadd.f32 %v440, %v617
        %619 = vmatmul.bf16.gmra.mxu0 %v492
        %v620 = vpop.f32.mrf.mxu0
        %v621 = vadd.f32 %v440, %v620
        %v622 = vpop.f32.mrf.mxu0
        %v623 = vadd.f32 %v440, %v622
        %624 = vmatmul.bf16.gmra.mxu0 %v495
        %v625 = vpop.f32.mrf.mxu0
        %v626 = vadd.f32 %v440, %v625
        %v627 = vpop.f32.mrf.mxu0
        %v628 = vadd.f32 %v440, %v627
        %629 = vmatmul.bf16.gmra.mxu0 %v498
        %v630 = vpop.f32.mrf.mxu0
        %v631 = vadd.f32 %v440, %v630
        %v632 = vpop.f32.mrf.mxu0
        %v633 = vadd.f32 %v440, %v632
        %634 = vmatmul.bf16.gmra.mxu0 %v501
        %v635 = vpop.f32.mrf.mxu0
        %v636 = vadd.f32 %v440, %v635
        %v637 = vpop.f32.mrf.mxu0
        %v638 = vadd.f32 %v440, %v637
        %639 = vmatmul.bf16.gmra.mxu0 %v504
        %v640 = vpop.f32.mrf.mxu0
        %v641 = vadd.f32 %v440, %v640
        %v642 = vpop.f32.mrf.mxu0
        %v643 = vadd.f32 %v440, %v642
        %644 = vmatmul.bf16.gmra.mxu0 %v507
        %v645 = vpop.f32.mrf.mxu0
        %v646 = vadd.f32 %v440, %v645
        %v647 = vpop.f32.mrf.mxu0
        %v648 = vadd.f32 %v440, %v647
        %649 = vmatmul.bf16.gmra.mxu0 %v510
        %v650 = vpop.f32.mrf.mxu0
        %v651 = vadd.f32 %v440, %v650
        %v652 = vpop.f32.mrf.mxu0
        %v653 = vadd.f32 %v440, %v652
        %654 = vmatmul.bf16.gmra.mxu0 %v513
        %v655 = vpop.f32.mrf.mxu0
        %v656 = vadd.f32 %v440, %v655
        %v657 = vpop.f32.mrf.mxu0
        %v658 = vadd.f32 %v440, %v657
        %659 = vmatmul.bf16.gmra.mxu0 %v516
        %v660 = vpop.f32.mrf.mxu0
        %v661 = vadd.f32 %v440, %v660
        %v662 = vpop.f32.mrf.mxu0
        %v663 = vadd.f32 %v440, %v662
        %664 = vmatmul.bf16.gmra.mxu0 %v519
        %v665 = vpop.f32.mrf.mxu0
        %v666 = vadd.f32 %v440, %v665
        %v667 = vpop.f32.mrf.mxu0
        %v668 = vadd.f32 %v440, %v667
        %669 = vmatmul.bf16.gmra.mxu0 %v522
        %v670 = vpop.f32.mrf.mxu0
        %v671 = vadd.f32 %v440, %v670
        %v672 = vpop.f32.mrf.mxu0
        %v673 = vadd.f32 %v440, %v672
        %674 = vmatmul.bf16.gmra.mxu0 %v525
        %v675 = vpop.f32.mrf.mxu0
        %v676 = vadd.f32 %v440, %v675
        %v677 = vpop.f32.mrf.mxu0
        %v678 = vadd.f32 %v440, %v677
        %679 = vmatmul.bf16.gmra.mxu0 %v528
        %v680 = vpop.f32.mrf.mxu0
        %v681 = vadd.f32 %v440, %v680
        %v682 = vpop.f32.mrf.mxu0
        %v683 = vadd.f32 %v440, %v682
        %684 = vmatmul.bf16.gmra.mxu0 %v531
        %v685 = vpop.f32.mrf.mxu0
        %v686 = vadd.f32 %v440, %v685
        %v687 = vpop.f32.mrf.mxu0
        %v688 = vadd.f32 %v440, %v687
        %689 = vmatmul.bf16.gmra.mxu0 %v534
        %v690 = vpop.f32.mrf.mxu0
        %v691 = vadd.f32 %v440, %v690
        %v692 = vpop.f32.mrf.mxu0
        %v693 = vadd.f32 %v440, %v692
        %694 = vmatmul.bf16.gmra.mxu0 %v537
        %v695 = vpop.f32.mrf.mxu0
        %v696 = vadd.f32 %v440, %v695
        %v697 = vpop.f32.mrf.mxu0
        %v698 = vadd.f32 %v440, %v697
        %699 = vmatmul.bf16.gmra.mxu0 %v540
        %v700 = vpop.f32.mrf.mxu0
        %v701 = vadd.f32 %v440, %v700
        %v702 = vpop.f32.mrf.mxu0
        %v703 = vadd.f32 %v440, %v702
        %704 = vmatmul.bf16.gmra.mxu0 %v543
        %v705 = vpop.f32.mrf.mxu0
        %v706 = vadd.f32 %v440, %v705
        %v707 = vpop.f32.mrf.mxu0
        %v708 = vadd.f32 %v440, %v707
        %709 = vmatmul.bf16.gmra.mxu0 %v546
        %v710 = vpop.f32.mrf.mxu0
        %v711 = vadd.f32 %v440, %v710
        %v712 = vpop.f32.mrf.mxu0
        %v713 = vadd.f32 %v440, %v712
        %714 = vmatmul.bf16.gmra.mxu0 %v549
        %v715 = vpop.f32.mrf.mxu0
        %v716 = vadd.f32 %v440, %v715
        %v717 = vpop.f32.mrf.mxu0
        %v718 = vadd.f32 %v440, %v717
        %719 = vdwg.mxu0
        %v720 = vmax.f32 %v561, 0.0
        %v721 = vmax.f32 %v563, 0.0
        %v722 = vmax.f32 %v566, 0.0
        %v723 = vmax.f32 %v568, 0.0
        %v724 = vmax.f32 %v571, 0.0
        %v725 = vmax.f32 %v573, 0.0
        %v726 = vmax.f32 %v576, 0.0
        %v727 = vmax.f32 %v578, 0.0
        %v728 = vmax.f32 %v581, 0.0
        %v729 = vmax.f32 %v583, 0.0
        %v730 = vmax.f32 %v586, 0.0
        %v731 = vmax.f32 %v588, 0.0
        %v732 = vmax.f32 %v591, 0.0
        %v733 = vmax.f32 %v593, 0.0
        %v734 = vmax.f32 %v596, 0.0
        %v735 = vmax.f32 %v598, 0.0
        %v736 = vmax.f32 %v601, 0.0
        %v737 = vmax.f32 %v603, 0.0
        %v738 = vmax.f32 %v606, 0.0
        %v739 = vmax.f32 %v608, 0.0
        %v740 = vmax.f32 %v611, 0.0
        %v741 = vmax.f32 %v613, 0.0
        %v742 = vmax.f32 %v616, 0.0
        %v743 = vmax.f32 %v618, 0.0
        %v744 = vmax.f32 %v621, 0.0
        %v745 = vmax.f32 %v623, 0.0
        %v746 = vmax.f32 %v626, 0.0
        %v747 = vmax.f32 %v628, 0.0
        %v748 = vmax.f32 %v631, 0.0
        %v749 = vmax.f32 %v633, 0.0
        %v750 = vmax.f32 %v636, 0.0
        %v751 = vmax.f32 %v638, 0.0
        %v752 = vmax.f32 %v641, 0.0
        %v753 = vmax.f32 %v643, 0.0
        %v754 = vmax.f32 %v646, 0.0
        %v755 = vmax.f32 %v648, 0.0
        %v756 = vmax.f32 %v651, 0.0
        %v757 = vmax.f32 %v653, 0.0
        %v758 = vmax.f32 %v656, 0.0
        %v759 = vmax.f32 %v658, 0.0
        %v760 = vmax.f32 %v661, 0.0
        %v761 = vmax.f32 %v663, 0.0
        %v762 = vmax.f32 %v666, 0.0
        %v763 = vmax.f32 %v668, 0.0
        %v764 = vmax.f32 %v671, 0.0
        %v765 = vmax.f32 %v673, 0.0
        %v766 = vmax.f32 %v676, 0.0
        %v767 = vmax.f32 %v678, 0.0
        %v768 = vmax.f32 %v681, 0.0
        %v769 = vmax.f32 %v683, 0.0
        %v770 = vmax.f32 %v686, 0.0
        %v771 = vmax.f32 %v688, 0.0
        %v772 = vmax.f32 %v691, 0.0
        %v773 = vmax.f32 %v693, 0.0
        %v774 = vmax.f32 %v696, 0.0
        %v775 = vmax.f32 %v698, 0.0
        %v776 = vmax.f32 %v701, 0.0
        %v777 = vmax.f32 %v703, 0.0
        %v778 = vmax.f32 %v706, 0.0
        %v779 = vmax.f32 %v708, 0.0
        %v780 = vmax.f32 %v711, 0.0
        %v781 = vmax.f32 %v713, 0.0
        %v782 = vmax.f32 %v716, 0.0
        %v783 = vmax.f32 %v718, 0.0
        %v784 = vpack.c.bf16 %v721, %v720
        %v785 = vpack.c.bf16 %v723, %v722
        %v786 = vpack.c.bf16 %v725, %v724
        %v787 = vpack.c.bf16 %v727, %v726
        %v788 = vpack.c.bf16 %v729, %v728
        %v789 = vpack.c.bf16 %v731, %v730
        %v790 = vpack.c.bf16 %v733, %v732
        %v791 = vpack.c.bf16 %v735, %v734
        %v792 = vpack.c.bf16 %v737, %v736
        %v793 = vpack.c.bf16 %v739, %v738
        %v794 = vpack.c.bf16 %v741, %v740
        %v795 = vpack.c.bf16 %v743, %v742
        %v796 = vpack.c.bf16 %v745, %v744
        %v797 = vpack.c.bf16 %v747, %v746
        %v798 = vpack.c.bf16 %v749, %v748
        %v799 = vpack.c.bf16 %v751, %v750
        %v800 = vpack.c.bf16 %v753, %v752
        %v801 = vpack.c.bf16 %v755, %v754
        %v802 = vpack.c.bf16 %v757, %v756
        %v803 = vpack.c.bf16 %v759, %v758
        %v804 = vpack.c.bf16 %v761, %v760
        %v805 = vpack.c.bf16 %v763, %v762
        %v806 = vpack.c.bf16 %v765, %v764
        %v807 = vpack.c.bf16 %v767, %v766
        %v808 = vpack.c.bf16 %v769, %v768
        %v809 = vpack.c.bf16 %v771, %v770
        %v810 = vpack.c.bf16 %v773, %v772
        %v811 = vpack.c.bf16 %v775, %v774
        %v812 = vpack.c.bf16 %v777, %v776
        %v813 = vpack.c.bf16 %v779, %v778
        %v814 = vpack.c.bf16 %v781, %v780
        %v815 = vpack.c.bf16 %v783, %v782
        %v816 = vld [vmem:[%s3] sm:$0xf]
        %v817 = vld [vmem:[%s3 + $0x4] sm:$0xf]
        %v818 = vld [vmem:[%s3 + $0x8] sm:$0xf]
        %v819 = vld [vmem:[%s3 + $0xc] sm:$0xf]
        %v824 = vunpack.c.l.b16 %v816
        %v825 = vunpack.c.l.b16 %v817
        %v826 = vunpack.c.l.b16 %v818
        %v827 = vunpack.c.l.b16 %v819
        %v828 = vpack.c.b16 %v825, %v824
        %v829 = vpack.c.b16 %v827, %v826
        %v833 = vsel %vm454, %v784, 0
        %v836 = vsel %vm454, %v785, 0
        %v839 = vsel %vm454, %v786, 0
        %v842 = vsel %vm454, %v787, 0
        %v845 = vsel %vm454, %v788, 0
        %v848 = vsel %vm454, %v789, 0
        %v851 = vsel %vm454, %v790, 0
        %v854 = vsel %vm454, %v791, 0
        %v857 = vsel %vm454, %v792, 0
        %v860 = vsel %vm454, %v793, 0
        %v863 = vsel %vm454, %v794, 0
        %v866 = vsel %vm454, %v795, 0
        %v869 = vsel %vm454, %v796, 0
        %v872 = vsel %vm454, %v797, 0
        %v875 = vsel %vm454, %v798, 0
        %v878 = vsel %vm454, %v799, 0
        %v881 = vsel %vm454, %v800, 0
        %v884 = vsel %vm454, %v801, 0
        %v887 = vsel %vm454, %v802, 0
        %v890 = vsel %vm454, %v803, 0
        %v893 = vsel %vm454, %v804, 0
        %v896 = vsel %vm454, %v805, 0
        %v899 = vsel %vm454, %v806, 0
        %v902 = vsel %vm454, %v807, 0
        %v905 = vsel %vm454, %v808, 0
        %v908 = vsel %vm454, %v809, 0
        %v911 = vsel %vm454, %v810, 0
        %v914 = vsel %vm454, %v811, 0
        %v917 = vsel %vm454, %v812, 0
        %v920 = vsel %vm454, %v813, 0
        %v923 = vsel %vm454, %v814, 0
        %v926 = vsel %vm454, %v815, 0
        %928 = vmatpush.bf16.msra.mxu0 0
        %929 = vmatpush.bf16.msra.mxu0 0
        %930 = vmatpush.bf16.msra.mxu0 0
        %931 = vmatpush.bf16.msra.mxu0 0
        %932 = vmatpush.bf16.msra.mxu0 0
        %933 = vmatpush.bf16.msra.mxu0 0
        %934 = vmatpush.bf16.msra.mxu0 %v829
        %935 = vmatpush.bf16.msra.mxu0 %v828
        %936 = vmatmul.bf16.gmra.mxu0 %v833
        %v937 = vpop.f32.mrf.mxu0
        %v938 = vadd.f32 0.0, %v937
        %v939 = vpop.f32.mrf.mxu0
        %v940 = vadd.f32 0.0, %v939
        %941 = vmatmul.bf16.gmra.mxu0 %v836
        %v942 = vpop.f32.mrf.mxu0
        %v943 = vadd.f32 0.0, %v942
        %v944 = vpop.f32.mrf.mxu0
        %v945 = vadd.f32 0.0, %v944
        %946 = vmatmul.bf16.gmra.mxu0 %v839
        %v947 = vpop.f32.mrf.mxu0
        %v948 = vadd.f32 0.0, %v947
        %v949 = vpop.f32.mrf.mxu0
        %v950 = vadd.f32 0.0, %v949
        %951 = vmatmul.bf16.gmra.mxu0 %v842
        %v952 = vpop.f32.mrf.mxu0
        %v953 = vadd.f32 0.0, %v952
        %v954 = vpop.f32.mrf.mxu0
        %v955 = vadd.f32 0.0, %v954
        %956 = vmatmul.bf16.gmra.mxu0 %v845
        %v957 = vpop.f32.mrf.mxu0
        %v958 = vadd.f32 0.0, %v957
        %v959 = vpop.f32.mrf.mxu0
        %v960 = vadd.f32 0.0, %v959
        %961 = vmatmul.bf16.gmra.mxu0 %v848
        %v962 = vpop.f32.mrf.mxu0
        %v963 = vadd.f32 0.0, %v962
        %v964 = vpop.f32.mrf.mxu0
        %v965 = vadd.f32 0.0, %v964
        %966 = vmatmul.bf16.gmra.mxu0 %v851
        %v967 = vpop.f32.mrf.mxu0
        %v968 = vadd.f32 0.0, %v967
        %v969 = vpop.f32.mrf.mxu0
        %v970 = vadd.f32 0.0, %v969
        %971 = vmatmul.bf16.gmra.mxu0 %v854
        %v972 = vpop.f32.mrf.mxu0
        %v973 = vadd.f32 0.0, %v972
        %v974 = vpop.f32.mrf.mxu0
        %v975 = vadd.f32 0.0, %v974
        %976 = vmatmul.bf16.gmra.mxu0 %v857
        %v977 = vpop.f32.mrf.mxu0
        %v978 = vadd.f32 0.0, %v977
        %v979 = vpop.f32.mrf.mxu0
        %v980 = vadd.f32 0.0, %v979
        %981 = vmatmul.bf16.gmra.mxu0 %v860
        %v982 = vpop.f32.mrf.mxu0
        %v983 = vadd.f32 0.0, %v982
        %v984 = vpop.f32.mrf.mxu0
        %v985 = vadd.f32 0.0, %v984
        %986 = vmatmul.bf16.gmra.mxu0 %v863
        %v987 = vpop.f32.mrf.mxu0
        %v988 = vadd.f32 0.0, %v987
        %v989 = vpop.f32.mrf.mxu0
        %v990 = vadd.f32 0.0, %v989
        %991 = vmatmul.bf16.gmra.mxu0 %v866
        %v992 = vpop.f32.mrf.mxu0
        %v993 = vadd.f32 0.0, %v992
        %v994 = vpop.f32.mrf.mxu0
        %v995 = vadd.f32 0.0, %v994
        %996 = vmatmul.bf16.gmra.mxu0 %v869
        %v997 = vpop.f32.mrf.mxu0
        %v998 = vadd.f32 0.0, %v997
        %v999 = vpop.f32.mrf.mxu0
        %v1000 = vadd.f32 0.0, %v999
        %1001 = vmatmul.bf16.gmra.mxu0 %v872
        %v1002 = vpop.f32.mrf.mxu0
        %v1003 = vadd.f32 0.0, %v1002
        %v1004 = vpop.f32.mrf.mxu0
        %v1005 = vadd.f32 0.0, %v1004
        %1006 = vmatmul.bf16.gmra.mxu0 %v875
        %v1007 = vpop.f32.mrf.mxu0
        %v1008 = vadd.f32 0.0, %v1007
        %v1009 = vpop.f32.mrf.mxu0
        %v1010 = vadd.f32 0.0, %v1009
        %1011 = vmatmul.bf16.gmra.mxu0 %v878
        %v1012 = vpop.f32.mrf.mxu0
        %v1013 = vadd.f32 0.0, %v1012
        %v1014 = vpop.f32.mrf.mxu0
        %v1015 = vadd.f32 0.0, %v1014
        %1016 = vmatmul.bf16.gmra.mxu0 %v881
        %v1017 = vpop.f32.mrf.mxu0
        %v1018 = vadd.f32 0.0, %v1017
        %v1019 = vpop.f32.mrf.mxu0
        %v1020 = vadd.f32 0.0, %v1019
        %1021 = vmatmul.bf16.gmra.mxu0 %v884
        %v1022 = vpop.f32.mrf.mxu0
        %v1023 = vadd.f32 0.0, %v1022
        %v1024 = vpop.f32.mrf.mxu0
        %v1025 = vadd.f32 0.0, %v1024
        %1026 = vmatmul.bf16.gmra.mxu0 %v887
        %v1027 = vpop.f32.mrf.mxu0
        %v1028 = vadd.f32 0.0, %v1027
        %v1029 = vpop.f32.mrf.mxu0
        %v1030 = vadd.f32 0.0, %v1029
        %1031 = vmatmul.bf16.gmra.mxu0 %v890
        %v1032 = vpop.f32.mrf.mxu0
        %v1033 = vadd.f32 0.0, %v1032
        %v1034 = vpop.f32.mrf.mxu0
        %v1035 = vadd.f32 0.0, %v1034
        %1036 = vmatmul.bf16.gmra.mxu0 %v893
        %v1037 = vpop.f32.mrf.mxu0
        %v1038 = vadd.f32 0.0, %v1037
        %v1039 = vpop.f32.mrf.mxu0
        %v1040 = vadd.f32 0.0, %v1039
        %1041 = vmatmul.bf16.gmra.mxu0 %v896
        %v1042 = vpop.f32.mrf.mxu0
        %v1043 = vadd.f32 0.0, %v1042
        %v1044 = vpop.f32.mrf.mxu0
        %v1045 = vadd.f32 0.0, %v1044
        %1046 = vmatmul.bf16.gmra.mxu0 %v899
        %v1047 = vpop.f32.mrf.mxu0
        %v1048 = vadd.f32 0.0, %v1047
        %v1049 = vpop.f32.mrf.mxu0
        %v1050 = vadd.f32 0.0, %v1049
        %1051 = vmatmul.bf16.gmra.mxu0 %v902
        %v1052 = vpop.f32.mrf.mxu0
        %v1053 = vadd.f32 0.0, %v1052
        %v1054 = vpop.f32.mrf.mxu0
        %v1055 = vadd.f32 0.0, %v1054
        %1056 = vmatmul.bf16.gmra.mxu0 %v905
        %v1057 = vpop.f32.mrf.mxu0
        %v1058 = vadd.f32 0.0, %v1057
        %v1059 = vpop.f32.mrf.mxu0
        %v1060 = vadd.f32 0.0, %v1059
        %1061 = vmatmul.bf16.gmra.mxu0 %v908
        %v1062 = vpop.f32.mrf.mxu0
        %v1063 = vadd.f32 0.0, %v1062
        %v1064 = vpop.f32.mrf.mxu0
        %v1065 = vadd.f32 0.0, %v1064
        %1066 = vmatmul.bf16.gmra.mxu0 %v911
        %v1067 = vpop.f32.mrf.mxu0
        %v1068 = vadd.f32 0.0, %v1067
        %v1069 = vpop.f32.mrf.mxu0
        %v1070 = vadd.f32 0.0, %v1069
        %1071 = vmatmul.bf16.gmra.mxu0 %v914
        %v1072 = vpop.f32.mrf.mxu0
        %v1073 = vadd.f32 0.0, %v1072
        %v1074 = vpop.f32.mrf.mxu0
        %v1075 = vadd.f32 0.0, %v1074
        %1076 = vmatmul.bf16.gmra.mxu0 %v917
        %v1077 = vpop.f32.mrf.mxu0
        %v1078 = vadd.f32 0.0, %v1077
        %v1079 = vpop.f32.mrf.mxu0
        %v1080 = vadd.f32 0.0, %v1079
        %1081 = vmatmul.bf16.gmra.mxu0 %v920
        %v1082 = vpop.f32.mrf.mxu0
        %v1083 = vadd.f32 0.0, %v1082
        %v1084 = vpop.f32.mrf.mxu0
        %v1085 = vadd.f32 0.0, %v1084
        %1086 = vmatmul.bf16.gmra.mxu0 %v923
        %v1087 = vpop.f32.mrf.mxu0
        %v1088 = vadd.f32 0.0, %v1087
        %v1089 = vpop.f32.mrf.mxu0
        %v1090 = vadd.f32 0.0, %v1089
        %1091 = vmatmul.bf16.gmra.mxu0 %v926
        %v1092 = vpop.f32.mrf.mxu0
        %v1093 = vadd.f32 0.0, %v1092
        %v1094 = vpop.f32.mrf.mxu0
        %v1095 = vadd.f32 0.0, %v1094
        %1096 = vdwg.mxu0
        %v1097 = vpack.c.bf16 %v275, %v274
        %v1098 = vpack.c.bf16 %v277, %v276
        %v1099 = vpack.c.bf16 %v279, %v278
        %v1100 = vpack.c.bf16 %v281, %v280
        %v1101 = vpack.c.bf16 %v283, %v282
        %v1102 = vpack.c.bf16 %v285, %v284
        %v1103 = vpack.c.bf16 %v287, %v286
        %v1104 = vpack.c.bf16 %v289, %v288
        %v1105 = vpack.c.bf16 %v291, %v290
        %v1106 = vpack.c.bf16 %v293, %v292
        %v1107 = vpack.c.bf16 %v295, %v294
        %v1108 = vpack.c.bf16 %v297, %v296
        %v1109 = vpack.c.bf16 %v299, %v298
        %v1110 = vpack.c.bf16 %v301, %v300
        %v1111 = vpack.c.bf16 %v303, %v302
        %v1112 = vpack.c.bf16 %v305, %v304
        %v1113 = vpack.c.bf16 %v307, %v306
        %v1114 = vpack.c.bf16 %v309, %v308
        %v1115 = vpack.c.bf16 %v311, %v310
        %v1116 = vpack.c.bf16 %v313, %v312
        %v1117 = vpack.c.bf16 %v315, %v314
        %v1118 = vpack.c.bf16 %v317, %v316
        %v1119 = vpack.c.bf16 %v319, %v318
        %v1120 = vpack.c.bf16 %v321, %v320
        %v1121 = vpack.c.bf16 %v323, %v322
        %v1122 = vpack.c.bf16 %v325, %v324
        %v1123 = vpack.c.bf16 %v327, %v326
        %v1124 = vpack.c.bf16 %v329, %v328
        %v1125 = vpack.c.bf16 %v331, %v330
        %v1126 = vpack.c.bf16 %v333, %v332
        %v1127 = vpack.c.bf16 %v335, %v334
        %v1128 = vpack.c.bf16 %v337, %v336
        %v1129 = vld [vmem:[%s4] sm:$0xf]
        %v1130 = vld [vmem:[%s4 + $0x4] sm:$0xf]
        %v1131 = vld [vmem:[%s4 + $0x8] sm:$0xf]
        %v1132 = vld [vmem:[%s4 + $0xc] sm:$0xf]
        %v1137 = vunpack.c.l.b16 %v1129
        %v1138 = vunpack.c.l.b16 %v1130
        %v1139 = vunpack.c.l.b16 %v1131
        %v1140 = vunpack.c.l.b16 %v1132
        %v1141 = vpack.c.b16 %v1138, %v1137
        %v1142 = vpack.c.b16 %v1140, %v1139
        %v1146 = vsel %vm454, %v1097, 0
        %v1149 = vsel %vm454, %v1098, 0
        %v1152 = vsel %vm454, %v1099, 0
        %v1155 = vsel %vm454, %v1100, 0
        %v1158 = vsel %vm454, %v1101, 0
        %v1161 = vsel %vm454, %v1102, 0
        %v1164 = vsel %vm454, %v1103, 0
        %v1167 = vsel %vm454, %v1104, 0
        %v1170 = vsel %vm454, %v1105, 0
        %v1173 = vsel %vm454, %v1106, 0
        %v1176 = vsel %vm454, %v1107, 0
        %v1179 = vsel %vm454, %v1108, 0
        %v1182 = vsel %vm454, %v1109, 0
        %v1185 = vsel %vm454, %v1110, 0
        %v1188 = vsel %vm454, %v1111, 0
        %v1191 = vsel %vm454, %v1112, 0
        %v1194 = vsel %vm454, %v1113, 0
        %v1197 = vsel %vm454, %v1114, 0
        %v1200 = vsel %vm454, %v1115, 0
        %v1203 = vsel %vm454, %v1116, 0
        %v1206 = vsel %vm454, %v1117, 0
        %v1209 = vsel %vm454, %v1118, 0
        %v1212 = vsel %vm454, %v1119, 0
        %v1215 = vsel %vm454, %v1120, 0
        %v1218 = vsel %vm454, %v1121, 0
        %v1221 = vsel %vm454, %v1122, 0
        %v1224 = vsel %vm454, %v1123, 0
        %v1227 = vsel %vm454, %v1124, 0
        %v1230 = vsel %vm454, %v1125, 0
        %v1233 = vsel %vm454, %v1126, 0
        %v1236 = vsel %vm454, %v1127, 0
        %v1239 = vsel %vm454, %v1128, 0
        %1241 = vmatpush.bf16.msra.mxu0 0
        %1242 = vmatpush.bf16.msra.mxu0 0
        %1243 = vmatpush.bf16.msra.mxu0 0
        %1244 = vmatpush.bf16.msra.mxu0 0
        %1245 = vmatpush.bf16.msra.mxu0 0
        %1246 = vmatpush.bf16.msra.mxu0 0
        %1247 = vmatpush.bf16.msra.mxu0 %v1142
        %1248 = vmatpush.bf16.msra.mxu0 %v1141
        %1249 = vmatmul.bf16.gmra.mxu0 %v1146
        %v1250 = vpop.f32.mrf.mxu0
        %v1251 = vadd.f32 %v938, %v1250
        %v1252 = vpop.f32.mrf.mxu0
        %v1253 = vadd.f32 %v940, %v1252
        %1254 = vmatmul.bf16.gmra.mxu0 %v1149
        %v1255 = vpop.f32.mrf.mxu0
        %v1256 = vadd.f32 %v943, %v1255
        %v1257 = vpop.f32.mrf.mxu0
        %v1258 = vadd.f32 %v945, %v1257
        %1259 = vmatmul.bf16.gmra.mxu0 %v1152
        %v1260 = vpop.f32.mrf.mxu0
        %v1261 = vadd.f32 %v948, %v1260
        %v1262 = vpop.f32.mrf.mxu0
        %v1263 = vadd.f32 %v950, %v1262
        %1264 = vmatmul.bf16.gmra.mxu0 %v1155
        %v1265 = vpop.f32.mrf.mxu0
        %v1266 = vadd.f32 %v953, %v1265
        %v1267 = vpop.f32.mrf.mxu0
        %v1268 = vadd.f32 %v955, %v1267
        %1269 = vmatmul.bf16.gmra.mxu0 %v1158
        %v1270 = vpop.f32.mrf.mxu0
        %v1271 = vadd.f32 %v958, %v1270
        %v1272 = vpop.f32.mrf.mxu0
        %v1273 = vadd.f32 %v960, %v1272
        %1274 = vmatmul.bf16.gmra.mxu0 %v1161
        %v1275 = vpop.f32.mrf.mxu0
        %v1276 = vadd.f32 %v963, %v1275
        %v1277 = vpop.f32.mrf.mxu0
        %v1278 = vadd.f32 %v965, %v1277
        %1279 = vmatmul.bf16.gmra.mxu0 %v1164
        %v1280 = vpop.f32.mrf.mxu0
        %v1281 = vadd.f32 %v968, %v1280
        %v1282 = vpop.f32.mrf.mxu0
        %v1283 = vadd.f32 %v970, %v1282
        %1284 = vmatmul.bf16.gmra.mxu0 %v1167
        %v1285 = vpop.f32.mrf.mxu0
        %v1286 = vadd.f32 %v973, %v1285
        %v1287 = vpop.f32.mrf.mxu0
        %v1288 = vadd.f32 %v975, %v1287
        %1289 = vmatmul.bf16.gmra.mxu0 %v1170
        %v1290 = vpop.f32.mrf.mxu0
        %v1291 = vadd.f32 %v978, %v1290
        %v1292 = vpop.f32.mrf.mxu0
        %v1293 = vadd.f32 %v980, %v1292
        %1294 = vmatmul.bf16.gmra.mxu0 %v1173
        %v1295 = vpop.f32.mrf.mxu0
        %v1296 = vadd.f32 %v983, %v1295
        %v1297 = vpop.f32.mrf.mxu0
        %v1298 = vadd.f32 %v985, %v1297
        %1299 = vmatmul.bf16.gmra.mxu0 %v1176
        %v1300 = vpop.f32.mrf.mxu0
        %v1301 = vadd.f32 %v988, %v1300
        %v1302 = vpop.f32.mrf.mxu0
        %v1303 = vadd.f32 %v990, %v1302
        %1304 = vmatmul.bf16.gmra.mxu0 %v1179
        %v1305 = vpop.f32.mrf.mxu0
        %v1306 = vadd.f32 %v993, %v1305
        %v1307 = vpop.f32.mrf.mxu0
        %v1308 = vadd.f32 %v995, %v1307
        %1309 = vmatmul.bf16.gmra.mxu0 %v1182
        %v1310 = vpop.f32.mrf.mxu0
        %v1311 = vadd.f32 %v998, %v1310
        %v1312 = vpop.f32.mrf.mxu0
        %v1313 = vadd.f32 %v1000, %v1312
        %1314 = vmatmul.bf16.gmra.mxu0 %v1185
        %v1315 = vpop.f32.mrf.mxu0
        %v1316 = vadd.f32 %v1003, %v1315
        %v1317 = vpop.f32.mrf.mxu0
        %v1318 = vadd.f32 %v1005, %v1317
        %1319 = vmatmul.bf16.gmra.mxu0 %v1188
        %v1320 = vpop.f32.mrf.mxu0
        %v1321 = vadd.f32 %v1008, %v1320
        %v1322 = vpop.f32.mrf.mxu0
        %v1323 = vadd.f32 %v1010, %v1322
        %1324 = vmatmul.bf16.gmra.mxu0 %v1191
        %v1325 = vpop.f32.mrf.mxu0
        %v1326 = vadd.f32 %v1013, %v1325
        %v1327 = vpop.f32.mrf.mxu0
        %v1328 = vadd.f32 %v1015, %v1327
        %1329 = vmatmul.bf16.gmra.mxu0 %v1194
        %v1330 = vpop.f32.mrf.mxu0
        %v1331 = vadd.f32 %v1018, %v1330
        %v1332 = vpop.f32.mrf.mxu0
        %v1333 = vadd.f32 %v1020, %v1332
        %1334 = vmatmul.bf16.gmra.mxu0 %v1197
        %v1335 = vpop.f32.mrf.mxu0
        %v1336 = vadd.f32 %v1023, %v1335
        %v1337 = vpop.f32.mrf.mxu0
        %v1338 = vadd.f32 %v1025, %v1337
        %1339 = vmatmul.bf16.gmra.mxu0 %v1200
        %v1340 = vpop.f32.mrf.mxu0
        %v1341 = vadd.f32 %v1028, %v1340
        %v1342 = vpop.f32.mrf.mxu0
        %v1343 = vadd.f32 %v1030, %v1342
        %1344 = vmatmul.bf16.gmra.mxu0 %v1203
        %v1345 = vpop.f32.mrf.mxu0
        %v1346 = vadd.f32 %v1033, %v1345
        %v1347 = vpop.f32.mrf.mxu0
        %v1348 = vadd.f32 %v1035, %v1347
        %1349 = vmatmul.bf16.gmra.mxu0 %v1206
        %v1350 = vpop.f32.mrf.mxu0
        %v1351 = vadd.f32 %v1038, %v1350
        %v1352 = vpop.f32.mrf.mxu0
        %v1353 = vadd.f32 %v1040, %v1352
        %1354 = vmatmul.bf16.gmra.mxu0 %v1209
        %v1355 = vpop.f32.mrf.mxu0
        %v1356 = vadd.f32 %v1043, %v1355
        %v1357 = vpop.f32.mrf.mxu0
        %v1358 = vadd.f32 %v1045, %v1357
        %1359 = vmatmul.bf16.gmra.mxu0 %v1212
        %v1360 = vpop.f32.mrf.mxu0
        %v1361 = vadd.f32 %v1048, %v1360
        %v1362 = vpop.f32.mrf.mxu0
        %v1363 = vadd.f32 %v1050, %v1362
        %1364 = vmatmul.bf16.gmra.mxu0 %v1215
        %v1365 = vpop.f32.mrf.mxu0
        %v1366 = vadd.f32 %v1053, %v1365
        %v1367 = vpop.f32.mrf.mxu0
        %v1368 = vadd.f32 %v1055, %v1367
        %1369 = vmatmul.bf16.gmra.mxu0 %v1218
        %v1370 = vpop.f32.mrf.mxu0
        %v1371 = vadd.f32 %v1058, %v1370
        %v1372 = vpop.f32.mrf.mxu0
        %v1373 = vadd.f32 %v1060, %v1372
        %1374 = vmatmul.bf16.gmra.mxu0 %v1221
        %v1375 = vpop.f32.mrf.mxu0
        %v1376 = vadd.f32 %v1063, %v1375
        %v1377 = vpop.f32.mrf.mxu0
        %v1378 = vadd.f32 %v1065, %v1377
        %1379 = vmatmul.bf16.gmra.mxu0 %v1224
        %v1380 = vpop.f32.mrf.mxu0
        %v1381 = vadd.f32 %v1068, %v1380
        %v1382 = vpop.f32.mrf.mxu0
        %v1383 = vadd.f32 %v1070, %v1382
        %1384 = vmatmul.bf16.gmra.mxu0 %v1227
        %v1385 = vpop.f32.mrf.mxu0
        %v1386 = vadd.f32 %v1073, %v1385
        %v1387 = vpop.f32.mrf.mxu0
        %v1388 = vadd.f32 %v1075, %v1387
        %1389 = vmatmul.bf16.gmra.mxu0 %v1230
        %v1390 = vpop.f32.mrf.mxu0
        %v1391 = vadd.f32 %v1078, %v1390
        %v1392 = vpop.f32.mrf.mxu0
        %v1393 = vadd.f32 %v1080, %v1392
        %1394 = vmatmul.bf16.gmra.mxu0 %v1233
        %v1395 = vpop.f32.mrf.mxu0
        %v1396 = vadd.f32 %v1083, %v1395
        %v1397 = vpop.f32.mrf.mxu0
        %v1398 = vadd.f32 %v1085, %v1397
        %1399 = vmatmul.bf16.gmra.mxu0 %v1236
        %v1400 = vpop.f32.mrf.mxu0
        %v1401 = vadd.f32 %v1088, %v1400
        %v1402 = vpop.f32.mrf.mxu0
        %v1403 = vadd.f32 %v1090, %v1402
        %1404 = vmatmul.bf16.gmra.mxu0 %v1239
        %v1405 = vpop.f32.mrf.mxu0
        %v1406 = vadd.f32 %v1093, %v1405
        %v1407 = vpop.f32.mrf.mxu0
        %v1408 = vadd.f32 %v1095, %v1407
        %1409 = vdwg.mxu0
        %v1410 = vld [vmem:[%s5] sm:$0x1]
        %v1412 = vperm.slane %v1410, 0
        %v1414 = vadd.f32 %v1251, %v1412
        %v1415 = vadd.f32 %v1253, %v1412
        %v1416 = vadd.f32 %v1256, %v1412
        %v1417 = vadd.f32 %v1258, %v1412
        %v1418 = vadd.f32 %v1261, %v1412
        %v1419 = vadd.f32 %v1263, %v1412
        %v1420 = vadd.f32 %v1266, %v1412
        %v1421 = vadd.f32 %v1268, %v1412
        %v1422 = vadd.f32 %v1271, %v1412
        %v1423 = vadd.f32 %v1273, %v1412
        %v1424 = vadd.f32 %v1276, %v1412
        %v1425 = vadd.f32 %v1278, %v1412
        %v1426 = vadd.f32 %v1281, %v1412
        %v1427 = vadd.f32 %v1283, %v1412
        %v1428 = vadd.f32 %v1286, %v1412
        %v1429 = vadd.f32 %v1288, %v1412
        %v1430 = vadd.f32 %v1291, %v1412
        %v1431 = vadd.f32 %v1293, %v1412
        %v1432 = vadd.f32 %v1296, %v1412
        %v1433 = vadd.f32 %v1298, %v1412
        %v1434 = vadd.f32 %v1301, %v1412
        %v1435 = vadd.f32 %v1303, %v1412
        %v1436 = vadd.f32 %v1306, %v1412
        %v1437 = vadd.f32 %v1308, %v1412
        %v1438 = vadd.f32 %v1311, %v1412
        %v1439 = vadd.f32 %v1313, %v1412
        %v1440 = vadd.f32 %v1316, %v1412
        %v1441 = vadd.f32 %v1318, %v1412
        %v1442 = vadd.f32 %v1321, %v1412
        %v1443 = vadd.f32 %v1323, %v1412
        %v1444 = vadd.f32 %v1326, %v1412
        %v1445 = vadd.f32 %v1328, %v1412
        %v1446 = vadd.f32 %v1331, %v1412
        %v1447 = vadd.f32 %v1333, %v1412
        %v1448 = vadd.f32 %v1336, %v1412
        %v1449 = vadd.f32 %v1338, %v1412
        %v1450 = vadd.f32 %v1341, %v1412
        %v1451 = vadd.f32 %v1343, %v1412
        %v1452 = vadd.f32 %v1346, %v1412
        %v1453 = vadd.f32 %v1348, %v1412
        %v1454 = vadd.f32 %v1351, %v1412
        %v1455 = vadd.f32 %v1353, %v1412
        %v1456 = vadd.f32 %v1356, %v1412
        %v1457 = vadd.f32 %v1358, %v1412
        %v1458 = vadd.f32 %v1361, %v1412
        %v1459 = vadd.f32 %v1363, %v1412
        %v1460 = vadd.f32 %v1366, %v1412
        %v1461 = vadd.f32 %v1368, %v1412
        %v1462 = vadd.f32 %v1371, %v1412
        %v1463 = vadd.f32 %v1373, %v1412
        %v1464 = vadd.f32 %v1376, %v1412
        %v1465 = vadd.f32 %v1378, %v1412
        %v1466 = vadd.f32 %v1381, %v1412
        %v1467 = vadd.f32 %v1383, %v1412
        %v1468 = vadd.f32 %v1386, %v1412
        %v1469 = vadd.f32 %v1388, %v1412
        %v1470 = vadd.f32 %v1391, %v1412
        %v1471 = vadd.f32 %v1393, %v1412
        %v1472 = vadd.f32 %v1396, %v1412
        %v1473 = vadd.f32 %v1398, %v1412
        %v1474 = vadd.f32 %v1401, %v1412
        %v1475 = vadd.f32 %v1403, %v1412
        %v1476 = vadd.f32 %v1406, %v1412
        %v1477 = vadd.f32 %v1408, %v1412
        %vm1478 = vcmask 392192
        %1479 = vst.msk [vmem:[%s253] sm:$0xff] %vm1478, %v1414
        %1480 = vst.msk [vmem:[%s253 + $0x8] sm:$0xff] %vm1478, %v1415
        %1481 = vst.msk [vmem:[%s253 + $0x10] sm:$0xff] %vm1478, %v1416
        %1482 = vst.msk [vmem:[%s253 + $0x18] sm:$0xff] %vm1478, %v1417
        %1483 = vst.msk [vmem:[%s253 + $0x20] sm:$0xff] %vm1478, %v1418
        %1484 = vst.msk [vmem:[%s253 + $0x28] sm:$0xff] %vm1478, %v1419
        %1485 = vst.msk [vmem:[%s253 + $0x30] sm:$0xff] %vm1478, %v1420
        %1486 = vst.msk [vmem:[%s253 + $0x38] sm:$0xff] %vm1478, %v1421
        %1487 = vst.msk [vmem:[%s253 + $0x40] sm:$0xff] %vm1478, %v1422
        %1488 = vst.msk [vmem:[%s253 + $0x48] sm:$0xff] %vm1478, %v1423
        %1489 = vst.msk [vmem:[%s253 + $0x50] sm:$0xff] %vm1478, %v1424
        %1490 = vst.msk [vmem:[%s253 + $0x58] sm:$0xff] %vm1478, %v1425
        %1491 = vst.msk [vmem:[%s253 + $0x60] sm:$0xff] %vm1478, %v1426
        %1492 = vst.msk [vmem:[%s253 + $0x68] sm:$0xff] %vm1478, %v1427
        %1493 = vst.msk [vmem:[%s253 + $0x70] sm:$0xff] %vm1478, %v1428
        %1494 = vst.msk [vmem:[%s253 + $0x78] sm:$0xff] %vm1478, %v1429
        %1495 = vst.msk [vmem:[%s253 + $0x80] sm:$0xff] %vm1478, %v1430
        %1496 = vst.msk [vmem:[%s253 + $0x88] sm:$0xff] %vm1478, %v1431
        %1497 = vst.msk [vmem:[%s253 + $0x90] sm:$0xff] %vm1478, %v1432
        %1498 = vst.msk [vmem:[%s253 + $0x98] sm:$0xff] %vm1478, %v1433
        %1499 = vst.msk [vmem:[%s253 + $0xa0] sm:$0xff] %vm1478, %v1434
        %1500 = vst.msk [vmem:[%s253 + $0xa8] sm:$0xff] %vm1478, %v1435
        %1501 = vst.msk [vmem:[%s253 + $0xb0] sm:$0xff] %vm1478, %v1436
        %1502 = vst.msk [vmem:[%s253 + $0xb8] sm:$0xff] %vm1478, %v1437
        %1503 = vst.msk [vmem:[%s253 + $0xc0] sm:$0xff] %vm1478, %v1438
        %1504 = vst.msk [vmem:[%s253 + $0xc8] sm:$0xff] %vm1478, %v1439
        %1505 = vst.msk [vmem:[%s253 + $0xd0] sm:$0xff] %vm1478, %v1440
        %1506 = vst.msk [vmem:[%s253 + $0xd8] sm:$0xff] %vm1478, %v1441
        %1507 = vst.msk [vmem:[%s253 + $0xe0] sm:$0xff] %vm1478, %v1442
        %1508 = vst.msk [vmem:[%s253 + $0xe8] sm:$0xff] %vm1478, %v1443
        %1509 = vst.msk [vmem:[%s253 + $0xf0] sm:$0xff] %vm1478, %v1444
        %1510 = vst.msk [vmem:[%s253 + $0xf8] sm:$0xff] %vm1478, %v1445
        %1511 = vst.msk [vmem:[%s253 + $0x100] sm:$0xff] %vm1478, %v1446
        %1512 = vst.msk [vmem:[%s253 + $0x108] sm:$0xff] %vm1478, %v1447
        %1513 = vst.msk [vmem:[%s253 + $0x110] sm:$0xff] %vm1478, %v1448
        %1514 = vst.msk [vmem:[%s253 + $0x118] sm:$0xff] %vm1478, %v1449
        %1515 = vst.msk [vmem:[%s253 + $0x120] sm:$0xff] %vm1478, %v1450
        %1516 = vst.msk [vmem:[%s253 + $0x128] sm:$0xff] %vm1478, %v1451
        %1517 = vst.msk [vmem:[%s253 + $0x130] sm:$0xff] %vm1478, %v1452
        %1518 = vst.msk [vmem:[%s253 + $0x138] sm:$0xff] %vm1478, %v1453
        %1519 = vst.msk [vmem:[%s253 + $0x140] sm:$0xff] %vm1478, %v1454
        %1520 = vst.msk [vmem:[%s253 + $0x148] sm:$0xff] %vm1478, %v1455
        %1521 = vst.msk [vmem:[%s253 + $0x150] sm:$0xff] %vm1478, %v1456
        %1522 = vst.msk [vmem:[%s253 + $0x158] sm:$0xff] %vm1478, %v1457
        %1523 = vst.msk [vmem:[%s253 + $0x160] sm:$0xff] %vm1478, %v1458
        %1524 = vst.msk [vmem:[%s253 + $0x168] sm:$0xff] %vm1478, %v1459
        %1525 = vst.msk [vmem:[%s253 + $0x170] sm:$0xff] %vm1478, %v1460
        %1526 = vst.msk [vmem:[%s253 + $0x178] sm:$0xff] %vm1478, %v1461
        %1527 = vst.msk [vmem:[%s253 + $0x180] sm:$0xff] %vm1478, %v1462
        %1528 = vst.msk [vmem:[%s253 + $0x188] sm:$0xff] %vm1478, %v1463
        %1529 = vst.msk [vmem:[%s253 + $0x190] sm:$0xff] %vm1478, %v1464
        %1530 = vst.msk [vmem:[%s253 + $0x198] sm:$0xff] %vm1478, %v1465
        %1531 = vst.msk [vmem:[%s253 + $0x1a0] sm:$0xff] %vm1478, %v1466
        %1532 = vst.msk [vmem:[%s253 + $0x1a8] sm:$0xff] %vm1478, %v1467
        %1533 = vst.msk [vmem:[%s253 + $0x1b0] sm:$0xff] %vm1478, %v1468
        %1534 = vst.msk [vmem:[%s253 + $0x1b8] sm:$0xff] %vm1478, %v1469
        %1535 = vst.msk [vmem:[%s253 + $0x1c0] sm:$0xff] %vm1478, %v1470
        %1536 = vst.msk [vmem:[%s253 + $0x1c8] sm:$0xff] %vm1478, %v1471
        %1537 = vst.msk [vmem:[%s253 + $0x1d0] sm:$0xff] %vm1478, %v1472
        %1538 = vst.msk [vmem:[%s253 + $0x1d8] sm:$0xff] %vm1478, %v1473
        %1539 = vst.msk [vmem:[%s253 + $0x1e0] sm:$0xff] %vm1478, %v1474
        %1540 = vst.msk [vmem:[%s253 + $0x1e8] sm:$0xff] %vm1478, %v1475
        %1541 = vst.msk [vmem:[%s253 + $0x1f0] sm:$0xff] %vm1478, %v1476
        %1542 = vst.msk [vmem:[%s253 + $0x1f8] sm:$0xff] %vm1478, %v1477
        %s1543 = sand.u32 %s156, 1
        %s1544 = sand.u32 %s156, 1
        %s1545 = smul.addr %s1544, 512
        %s1546 = scalar_lea.vmem [#allocation2], %s1545
        // Predicated region
        $region45: #{tpu_custom_call.1} parent=43 // pred_check
          %p1547 = pneg %p166
        $region46: #{tpu_custom_call.1} parent=43 // pred_check_branch
          %1549 = sbr.rel (%p1547) target = $region48
        $region47: #{tpu_custom_call.1} parent=43 // pred_region
          %s1550 = smul.u32 64, %s17
          %s1551 = ssub.s32 75, %s1550
          %p1552 = scmp.lt.s32.totalorder %s1551, 64
          %s1553 = scalar_select %p1552, %s1551, 64
          %s1554 = smul.u32 8, %s1553
          %p1555 = scmp.ne.s32.totalorder 0, %s1554
          %s1556 = smul.addr %s1550, 8
          %s1557 = scalar_lea.vmem %s6, %s1556
          // Predicated region
          $region49: #{tpu_custom_call.1} parent=47 // pred_check
            %p1558 = pneg %p1555
          $region50: #{tpu_custom_call.1} parent=47 // pred_check_branch
            %1560 = sbr.rel (%p1558) target = $region52
          $region51: #{tpu_custom_call.1} parent=47 // pred_region
            // Predicated region
            $region53: #{tpu_custom_call.1} parent=51 // pred_check
              _
            $region54: #{tpu_custom_call.1} parent=51 // pred_check_branch
              %1562 = sbr.rel (0) target = $region56
            $region55: #{tpu_custom_call.1} parent=51 // pred_region
              // Predicated region
              $region75: #{tpu_custom_call.1} parent=55 // pred_check
                _
              $region76: #{tpu_custom_call.1} parent=55 // pred_check_branch
                %1674 = sbr.rel (0) target = $region78
              $region77: #{tpu_custom_call.1} parent=55 // pred_region
                %s1675 = sshrl.u32 %s1553, 5
                // While loop
                $region79: #{tpu_custom_call.1} parent=77 // loop_pre_header
                  _
                $region80: #{tpu_custom_call.1} parent=77 // loop_header
                  %s1677 = sphi 0, %s1679
                  %p1678 = scmp.ge.s32.totalorder %s1677, %s1675
                  %s1682 = sphi 0, %s1751
                  %s1683 = sphi %s1546, %s1754
                  %s1684 = sphi %s1557, %s1755
                $region81: #{tpu_custom_call.1} parent=77 // loop_header_branch
                  %1681 = sbr.rel (%p1678) target = $region85
                $region82: #{tpu_custom_call.1} parent=77 // loop_body
                  %v1685 = vld [vmem:[%s1683] sm:$0xff]
                  %1686 = vst [vmem:[%s1684] sm:$0xff] %v1685
                  %v1687 = vld [vmem:[%s1683 + $0x8] sm:$0xff]
                  %1688 = vst [vmem:[%s1684 + $0x8] sm:$0xff] %v1687
                  %v1689 = vld [vmem:[%s1683 + $0x10] sm:$0xff]
                  %1690 = vst [vmem:[%s1684 + $0x10] sm:$0xff] %v1689
                  %v1691 = vld [vmem:[%s1683 + $0x18] sm:$0xff]
                  %1692 = vst [vmem:[%s1684 + $0x18] sm:$0xff] %v1691
                  %v1693 = vld [vmem:[%s1683 + $0x20] sm:$0xff]
                  %1694 = vst [vmem:[%s1684 + $0x20] sm:$0xff] %v1693
                  %v1695 = vld [vmem:[%s1683 + $0x28] sm:$0xff]
                  %1696 = vst [vmem:[%s1684 + $0x28] sm:$0xff] %v1695
                  %v1697 = vld [vmem:[%s1683 + $0x30] sm:$0xff]
                  %1698 = vst [vmem:[%s1684 + $0x30] sm:$0xff] %v1697
                  %v1699 = vld [vmem:[%s1683 + $0x38] sm:$0xff]
                  %1700 = vst [vmem:[%s1684 + $0x38] sm:$0xff] %v1699
                  %v1701 = vld [vmem:[%s1683 + $0x40] sm:$0xff]
                  %1702 = vst [vmem:[%s1684 + $0x40] sm:$0xff] %v1701
                  %v1703 = vld [vmem:[%s1683 + $0x48] sm:$0xff]
                  %1704 = vst [vmem:[%s1684 + $0x48] sm:$0xff] %v1703
                  %v1705 = vld [vmem:[%s1683 + $0x50] sm:$0xff]
                  %1706 = vst [vmem:[%s1684 + $0x50] sm:$0xff] %v1705
                  %v1707 = vld [vmem:[%s1683 + $0x58] sm:$0xff]
                  %1708 = vst [vmem:[%s1684 + $0x58] sm:$0xff] %v1707
                  %v1709 = vld [vmem:[%s1683 + $0x60] sm:$0xff]
                  %1710 = vst [vmem:[%s1684 + $0x60] sm:$0xff] %v1709
                  %v1711 = vld [vmem:[%s1683 + $0x68] sm:$0xff]
                  %1712 = vst [vmem:[%s1684 + $0x68] sm:$0xff] %v1711
                  %v1713 = vld [vmem:[%s1683 + $0x70] sm:$0xff]
                  %1714 = vst [vmem:[%s1684 + $0x70] sm:$0xff] %v1713
                  %v1715 = vld [vmem:[%s1683 + $0x78] sm:$0xff]
                  %1716 = vst [vmem:[%s1684 + $0x78] sm:$0xff] %v1715
                  %v1717 = vld [vmem:[%s1683 + $0x80] sm:$0xff]
                  %1718 = vst [vmem:[%s1684 + $0x80] sm:$0xff] %v1717
                  %v1719 = vld [vmem:[%s1683 + $0x88] sm:$0xff]
                  %1720 = vst [vmem:[%s1684 + $0x88] sm:$0xff] %v1719
                  %v1721 = vld [vmem:[%s1683 + $0x90] sm:$0xff]
                  %1722 = vst [vmem:[%s1684 + $0x90] sm:$0xff] %v1721
                  %v1723 = vld [vmem:[%s1683 + $0x98] sm:$0xff]
                  %1724 = vst [vmem:[%s1684 + $0x98] sm:$0xff] %v1723
                  %v1725 = vld [vmem:[%s1683 + $0xa0] sm:$0xff]
                  %1726 = vst [vmem:[%s1684 + $0xa0] sm:$0xff] %v1725
                  %v1727 = vld [vmem:[%s1683 + $0xa8] sm:$0xff]
                  %1728 = vst [vmem:[%s1684 + $0xa8] sm:$0xff] %v1727
                  %v1729 = vld [vmem:[%s1683 + $0xb0] sm:$0xff]
                  %1730 = vst [vmem:[%s1684 + $0xb0] sm:$0xff] %v1729
                  %v1731 = vld [vmem:[%s1683 + $0xb8] sm:$0xff]
                  %1732 = vst [vmem:[%s1684 + $0xb8] sm:$0xff] %v1731
                  %v1733 = vld [vmem:[%s1683 + $0xc0] sm:$0xff]
                  %1734 = vst [vmem:[%s1684 + $0xc0] sm:$0xff] %v1733
                  %v1735 = vld [vmem:[%s1683 + $0xc8] sm:$0xff]
                  %1736 = vst [vmem:[%s1684 + $0xc8] sm:$0xff] %v1735
                  %v1737 = vld [vmem:[%s1683 + $0xd0] sm:$0xff]
                  %1738 = vst [vmem:[%s1684 + $0xd0] sm:$0xff] %v1737
                  %v1739 = vld [vmem:[%s1683 + $0xd8] sm:$0xff]
                  %1740 = vst [vmem:[%s1684 + $0xd8] sm:$0xff] %v1739
                  %v1741 = vld [vmem:[%s1683 + $0xe0] sm:$0xff]
                  %1742 = vst [vmem:[%s1684 + $0xe0] sm:$0xff] %v1741
                  %v1743 = vld [vmem:[%s1683 + $0xe8] sm:$0xff]
                  %1744 = vst [vmem:[%s1684 + $0xe8] sm:$0xff] %v1743
                  %v1745 = vld [vmem:[%s1683 + $0xf0] sm:$0xff]
                  %1746 = vst [vmem:[%s1684 + $0xf0] sm:$0xff] %v1745
                  %v1747 = vld [vmem:[%s1683 + $0xf8] sm:$0xff]
                  %1748 = vst [vmem:[%s1684 + $0xf8] sm:$0xff] %v1747
                  %s1749 = sadd.s32 1, %s1682
                  %p1750 = scmp.ge.s32.totalorder %s1749, %s1675
                  %s1751 = scalar_select %p1750, 0, %s1749
                  %s1752 = smul.u32 %s1751, 256
                  %s1753 = smul.u32 %s1751, 256
                  %s1754 = scalar_lea.vmem %s1546, %s1752 [#allocation2]
                  %s1755 = scalar_lea.vmem %s1557, %s1753
                $region83: #{tpu_custom_call.1} parent=77 // loop_footer
                  %s1679 = sadd.s32 %s1677, 1
                $region84: #{tpu_custom_call.1} parent=77 // loop_footer_branch
                  %1676 = sbr.rel target = $region80
                $region85: #{tpu_custom_call.1} parent=77 // loop_exit
                  _
                %s1756 = sshrl.u32 %s1553, 5
                %s1757 = sand.u32 %s1553, 31
                %s1758 = smul.u32 %s1756, 32
                %s1759 = smul.u32 8, %s1758
                %s1760 = scalar_lea.vmem %s1546, %s1759 [#allocation2]
                %s1761 = smul.u32 8, %s1758
                %s1762 = scalar_lea.vmem %s1557, %s1761
                // While loop
                $region86: #{tpu_custom_call.1} parent=77 // loop_pre_header
                  _
                $region87: #{tpu_custom_call.1} parent=77 // loop_header
                  %s1764 = sphi 0, %s1766
                  %p1765 = scmp.ge.s32.totalorder %s1764, %s1757
                  %s1769 = sphi 0, %s1776
                  %s1770 = sphi %s1760, %s1779
                  %s1771 = sphi %s1762, %s1780
                $region88: #{tpu_custom_call.1} parent=77 // loop_header_branch
                  %1768 = sbr.rel (%p1765) target = $region92
                $region89: #{tpu_custom_call.1} parent=77 // loop_body
                  %v1772 = vld [vmem:[%s1770] sm:$0xff]
                  %1773 = vst [vmem:[%s1771] sm:$0xff] %v1772
                  %s1774 = sadd.s32 1, %s1769
                  %p1775 = scmp.ge.s32.totalorder %s1774, %s1757
                  %s1776 = scalar_select %p1775, 0, %s1774
                  %s1777 = smul.u32 %s1776, 8
                  %s1778 = smul.u32 %s1776, 8
                  %s1779 = scalar_lea.vmem %s1760, %s1777 [#allocation2]
                  %s1780 = scalar_lea.vmem %s1762, %s1778
                $region90: #{tpu_custom_call.1} parent=77 // loop_footer
                  %s1766 = sadd.s32 %s1764, 1
                $region91: #{tpu_custom_call.1} parent=77 // loop_footer_branch
                  %1763 = sbr.rel target = $region87
                $region92: #{tpu_custom_call.1} parent=77 // loop_exit
                  _
              $region78: #{tpu_custom_call.1} parent=55 // pred_fallthru
                _
              // Predicated region
              $region93: #{tpu_custom_call.1} parent=55 // pred_check
                _
              $region94: #{tpu_custom_call.1} parent=55 // pred_check_branch
                %1782 = sbr.rel target = $region96
              $region95: #{tpu_custom_call.1} parent=55 // pred_region
                _
              $region96: #{tpu_custom_call.1} parent=55 // pred_fallthru
                _
            $region56: #{tpu_custom_call.1} parent=51 // pred_fallthru
              _
            // Predicated region
            $region57: #{tpu_custom_call.1} parent=51 // pred_check
              _
            $region58: #{tpu_custom_call.1} parent=51 // pred_check_branch
              %1564 = sbr.rel target = $region60
            $region59: #{tpu_custom_call.1} parent=51 // pred_region
              %s1566 = ssub.s32 256, 1
              %s1567 = sshrl.u32 %s1553, 5
              // While loop
              $region61: #{tpu_custom_call.1} parent=59 // loop_pre_header
                _
              $region62: #{tpu_custom_call.1} parent=59 // loop_header
                %s1569 = sphi 0, %s1571
                %p1570 = scmp.ge.s32.totalorder %s1569, %s1567
                %s1574 = sphi 0, %s1643
                %s1575 = sphi %s1546, %s1646
                %s1576 = sphi %s1557, %s1647
              $region63: #{tpu_custom_call.1} parent=59 // loop_header_branch
                %1573 = sbr.rel (%p1570) target = $region67
              $region64: #{tpu_custom_call.1} parent=59 // loop_body
                %v1577 = vld [vmem:[%s1575] sm:%s1566]
                %1578 = vst [vmem:[%s1576] sm:%s1566] %v1577
                %v1579 = vld [vmem:[%s1575 + $0x8] sm:%s1566]
                %1580 = vst [vmem:[%s1576 + $0x8] sm:%s1566] %v1579
                %v1581 = vld [vmem:[%s1575 + $0x10] sm:%s1566]
                %1582 = vst [vmem:[%s1576 + $0x10] sm:%s1566] %v1581
                %v1583 = vld [vmem:[%s1575 + $0x18] sm:%s1566]
                %1584 = vst [vmem:[%s1576 + $0x18] sm:%s1566] %v1583
                %v1585 = vld [vmem:[%s1575 + $0x20] sm:%s1566]
                %1586 = vst [vmem:[%s1576 + $0x20] sm:%s1566] %v1585
                %v1587 = vld [vmem:[%s1575 + $0x28] sm:%s1566]
                %1588 = vst [vmem:[%s1576 + $0x28] sm:%s1566] %v1587
                %v1589 = vld [vmem:[%s1575 + $0x30] sm:%s1566]
                %1590 = vst [vmem:[%s1576 + $0x30] sm:%s1566] %v1589
                %v1591 = vld [vmem:[%s1575 + $0x38] sm:%s1566]
                %1592 = vst [vmem:[%s1576 + $0x38] sm:%s1566] %v1591
                %v1593 = vld [vmem:[%s1575 + $0x40] sm:%s1566]
                %1594 = vst [vmem:[%s1576 + $0x40] sm:%s1566] %v1593
                %v1595 = vld [vmem:[%s1575 + $0x48] sm:%s1566]
                %1596 = vst [vmem:[%s1576 + $0x48] sm:%s1566] %v1595
                %v1597 = vld [vmem:[%s1575 + $0x50] sm:%s1566]
                %1598 = vst [vmem:[%s1576 + $0x50] sm:%s1566] %v1597
                %v1599 = vld [vmem:[%s1575 + $0x58] sm:%s1566]
                %1600 = vst [vmem:[%s1576 + $0x58] sm:%s1566] %v1599
                %v1601 = vld [vmem:[%s1575 + $0x60] sm:%s1566]
                %1602 = vst [vmem:[%s1576 + $0x60] sm:%s1566] %v1601
                %v1603 = vld [vmem:[%s1575 + $0x68] sm:%s1566]
                %1604 = vst [vmem:[%s1576 + $0x68] sm:%s1566] %v1603
                %v1605 = vld [vmem:[%s1575 + $0x70] sm:%s1566]
                %1606 = vst [vmem:[%s1576 + $0x70] sm:%s1566] %v1605
                %v1607 = vld [vmem:[%s1575 + $0x78] sm:%s1566]
                %1608 = vst [vmem:[%s1576 + $0x78] sm:%s1566] %v1607
                %v1609 = vld [vmem:[%s1575 + $0x80] sm:%s1566]
                %1610 = vst [vmem:[%s1576 + $0x80] sm:%s1566] %v1609
                %v1611 = vld [vmem:[%s1575 + $0x88] sm:%s1566]
                %1612 = vst [vmem:[%s1576 + $0x88] sm:%s1566] %v1611
                %v1613 = vld [vmem:[%s1575 + $0x90] sm:%s1566]
                %1614 = vst [vmem:[%s1576 + $0x90] sm:%s1566] %v1613
                %v1615 = vld [vmem:[%s1575 + $0x98] sm:%s1566]
                %1616 = vst [vmem:[%s1576 + $0x98] sm:%s1566] %v1615
                %v1617 = vld [vmem:[%s1575 + $0xa0] sm:%s1566]
                %1618 = vst [vmem:[%s1576 + $0xa0] sm:%s1566] %v1617
                %v1619 = vld [vmem:[%s1575 + $0xa8] sm:%s1566]
                %1620 = vst [vmem:[%s1576 + $0xa8] sm:%s1566] %v1619
                %v1621 = vld [vmem:[%s1575 + $0xb0] sm:%s1566]
                %1622 = vst [vmem:[%s1576 + $0xb0] sm:%s1566] %v1621
                %v1623 = vld [vmem:[%s1575 + $0xb8] sm:%s1566]
                %1624 = vst [vmem:[%s1576 + $0xb8] sm:%s1566] %v1623
                %v1625 = vld [vmem:[%s1575 + $0xc0] sm:%s1566]
                %1626 = vst [vmem:[%s1576 + $0xc0] sm:%s1566] %v1625
                %v1627 = vld [vmem:[%s1575 + $0xc8] sm:%s1566]
                %1628 = vst [vmem:[%s1576 + $0xc8] sm:%s1566] %v1627
                %v1629 = vld [vmem:[%s1575 + $0xd0] sm:%s1566]
                %1630 = vst [vmem:[%s1576 + $0xd0] sm:%s1566] %v1629
                %v1631 = vld [vmem:[%s1575 + $0xd8] sm:%s1566]
                %1632 = vst [vmem:[%s1576 + $0xd8] sm:%s1566] %v1631
                %v1633 = vld [vmem:[%s1575 + $0xe0] sm:%s1566]
                %1634 = vst [vmem:[%s1576 + $0xe0] sm:%s1566] %v1633
                %v1635 = vld [vmem:[%s1575 + $0xe8] sm:%s1566]
                %1636 = vst [vmem:[%s1576 + $0xe8] sm:%s1566] %v1635
                %v1637 = vld [vmem:[%s1575 + $0xf0] sm:%s1566]
                %1638 = vst [vmem:[%s1576 + $0xf0] sm:%s1566] %v1637
                %v1639 = vld [vmem:[%s1575 + $0xf8] sm:%s1566]
                %1640 = vst [vmem:[%s1576 + $0xf8] sm:%s1566] %v1639
                %s1641 = sadd.s32 1, %s1574
                %p1642 = scmp.ge.s32.totalorder %s1641, %s1567
                %s1643 = scalar_select %p1642, 0, %s1641
                %s1644 = smul.u32 %s1643, 256
                %s1645 = smul.u32 %s1643, 256
                %s1646 = scalar_lea.vmem %s1546, %s1644 [#allocation2]
                %s1647 = scalar_lea.vmem %s1557, %s1645
              $region65: #{tpu_custom_call.1} parent=59 // loop_footer
                %s1571 = sadd.s32 %s1569, 1
              $region66: #{tpu_custom_call.1} parent=59 // loop_footer_branch
                %1568 = sbr.rel target = $region62
              $region67: #{tpu_custom_call.1} parent=59 // loop_exit
                _
              %s1648 = sshrl.u32 %s1553, 5
              %s1649 = sand.u32 %s1553, 31
              %s1650 = smul.u32 %s1648, 32
              %s1651 = smul.u32 8, %s1650
              %s1652 = scalar_lea.vmem %s1546, %s1651 [#allocation2]
              %s1653 = smul.u32 8, %s1650
              %s1654 = scalar_lea.vmem %s1557, %s1653
              // While loop
              $region68: #{tpu_custom_call.1} parent=59 // loop_pre_header
                _
              $region69: #{tpu_custom_call.1} parent=59 // loop_header
                %s1656 = sphi 0, %s1658
                %p1657 = scmp.ge.s32.totalorder %s1656, %s1649
                %s1661 = sphi 0, %s1668
                %s1662 = sphi %s1652, %s1671
                %s1663 = sphi %s1654, %s1672
              $region70: #{tpu_custom_call.1} parent=59 // loop_header_branch
                %1660 = sbr.rel (%p1657) target = $region74
              $region71: #{tpu_custom_call.1} parent=59 // loop_body
                %v1664 = vld [vmem:[%s1662] sm:%s1566]
                %1665 = vst [vmem:[%s1663] sm:%s1566] %v1664
                %s1666 = sadd.s32 1, %s1661
                %p1667 = scmp.ge.s32.totalorder %s1666, %s1649
                %s1668 = scalar_select %p1667, 0, %s1666
                %s1669 = smul.u32 %s1668, 8
                %s1670 = smul.u32 %s1668, 8
                %s1671 = scalar_lea.vmem %s1652, %s1669 [#allocation2]
                %s1672 = scalar_lea.vmem %s1654, %s1670
              $region72: #{tpu_custom_call.1} parent=59 // loop_footer
                %s1658 = sadd.s32 %s1656, 1
              $region73: #{tpu_custom_call.1} parent=59 // loop_footer_branch
                %1655 = sbr.rel target = $region69
              $region74: #{tpu_custom_call.1} parent=59 // loop_exit
                _
            $region60: #{tpu_custom_call.1} parent=51 // pred_fallthru
              _
          $region52: #{tpu_custom_call.1} parent=47 // pred_fallthru
            _
          %1783 = vnop
        $region48: #{tpu_custom_call.1} parent=43 // pred_fallthru
          _
      $region44: #{tpu_custom_call.1} parent=5 // pred_fallthru
        _
      %p1784 = scmp.le.s32.totalorder 2, %s12
      // Predicated region
      $region97: #{tpu_custom_call.1} parent=5 // pred_check
        %p1785 = pneg %p1784
      $region98: #{tpu_custom_call.1} parent=5 // pred_check_branch
        %1787 = sbr.rel (%p1785) target = $region100
      $region99: #{tpu_custom_call.1} parent=5 // pred_region
        %s1788 = ssub.s32 %s12, 2
        // Predicated region
        $region101: #{tpu_custom_call.1} parent=99 // pred_check
          %p1789 = pneg %p172
        $region102: #{tpu_custom_call.1} parent=99 // pred_check_branch
          %1791 = sbr.rel (%p1789) target = $region104
        $region103: #{tpu_custom_call.1} parent=99 // pred_region
          %s1792 = sand.u32 %s157, 1
          %s1793 = sand.u32 %s157, 1
          %s1794 = smul.addr %s1793, 512
          %s1795 = scalar_lea.vmem [#allocation2], %s1794
        $region104: #{tpu_custom_call.1} parent=99 // pred_fallthru
          _
      $region100: #{tpu_custom_call.1} parent=5 // pred_fallthru
        _
    $region6: #{tpu_custom_call.1} parent=1 // loop_footer
      %s16 = sadd.s32 1, %s12
    $region7: #{tpu_custom_call.1} parent=1 // loop_footer_branch
      %11 = sbr.rel target = $region3
    $region8: #{tpu_custom_call.1} parent=1 // loop_exit
      _

</llo_original>
